<compile_context>
chip_gen: v7x
topology: tpu7x:2x2x1
jax: 0.10.0
libtpu: 0.0.40
codegen_flags: <defaults>
</compile_context>

<pallas_src>
import functools

import jax
import jax.numpy as jnp
import numpy as np
from jax import lax
from jax.experimental import pallas as pl
from jax.experimental.pallas import tpu as pltpu


def _channel_attention_kernel(x_ref, w1_ref, w2_ref, out_ref, sum_acc, max_acc,
                              *, hw, hw_tile, channels_last):
    # x_ref   : (1, Bt, C, hw_tile)  or, channel-last, (1, Bt, hw_tile, C)
    # w1_ref  : (Cr, C)   fc1 weight (Conv2d(C, Cr, 1).weight.squeeze())
    # w2_ref  : (C, Cr)   fc2 weight
    # out_ref : (1, Bt, C) sigmoid(avg_branch + max_branch) for these Bt elements
    # sum_acc / max_acc : (Bt, C) f32 VMEM scratch (running reduction over HW tiles)
    k = pl.program_id(1)
    n_k = pl.num_programs(1)

    x = x_ref[0]                      # native dtype; no full-tile f32 upcast
    red_axis = 1 if channels_last else 2   # axis of the 3-D tile that holds HW

    @pl.when(k == 0)
    def _():
        sum_acc[...] = jnp.zeros_like(sum_acc)
        max_acc[...] = jnp.full_like(max_acc, -jnp.inf)

    def _accumulate_full(xt):
        # Sum accumulated in f32; max reduced in native dtype, widened at combine.
        sum_acc[...] = sum_acc[...] + jnp.sum(xt, axis=red_axis, dtype=jnp.float32)
        max_acc[...] = jnp.maximum(max_acc[...],
                                   jnp.max(xt, axis=red_axis).astype(jnp.float32))

    if hw % hw_tile == 0:
        # Hot path: every spatial tile is full, no masking anywhere.
        _accumulate_full(x)
    else:
        # Only the final spatial tile is partial; keep the mask off the hot loop.
        @pl.when(k < n_k - 1)
        def _():
            _accumulate_full(x)

        @pl.when(k == n_k - 1)
        def _():
            pos = lax.broadcasted_iota(jnp.int32, x.shape, red_axis)
            valid = pos < (hw - k * hw_tile)
            x_sum = jnp.where(valid, x, 0.0)
            x_max = jnp.where(valid, x, -jnp.inf)
            sum_acc[...] = sum_acc[...] + jnp.sum(x_sum, axis=red_axis,
                                                  dtype=jnp.float32)
            max_acc[...] = jnp.maximum(max_acc[...],
                                       jnp.max(x_max, axis=red_axis)
                                       .astype(jnp.float32))

    @pl.when(k == n_k - 1)
    def _():
        bt = out_ref.shape[1]
        avg = sum_acc[...] * (1.0 / hw)                         # (Bt, C)
        pooled = jnp.concatenate([avg, max_acc[...]], axis=0)   # (2*Bt, C)
        w1 = w1_ref[...].astype(jnp.float32)                    # (Cr, C)
        w2 = w2_ref[...].astype(jnp.float32)                    # (C, Cr)
        # pooled @ w1.T (contract channel dims) -- no wrapper-side transposes.
        h = lax.dot_general(pooled, w1, (((1,), (1,)), ((), ())),
                            preferred_element_type=jnp.float32)  # (2*Bt, Cr)
        h = jnp.maximum(h, 0.0)
        y = lax.dot_general(h, w2, (((1,), (1,)), ((), ())),
                            preferred_element_type=jnp.float32)  # (2*Bt, C)
        out = jax.nn.sigmoid(y[:bt] + y[bt:])                   # (Bt, C)
        out_ref[0] = out.astype(out_ref.dtype)


def _largest_divisor_leq(n, cap):
    for d in range(min(n, cap), 0, -1):
        if n % d == 0:
            return d
    return 1


@functools.partial(jax.jit, static_argnames=("bt_max", "tile_bytes"))
def channel_attention(x, w1, w2, *, bt_max=8, tile_bytes=8 * 1024 * 1024):
    """x: (B, C, H, W). w1: (Cr, C) fc1 weight. w2: (C, Cr) fc2 weight.

    Returns sigmoid channel attention of shape (B, C, 1, 1), matching PyTorch.
    """
    B, C, H, W = x.shape
    Cr = w1.shape[0]
    HW = H * W
    itemsize = jnp.dtype(x.dtype).itemsize

    # Channel-last layout for small spatial maps with lane-friendly C: puts C on
    # the 128-lane axis (full occupancy) and reduces HW over sublanes.
    channels_last = (HW < 128) and (C >= 128)

    # --- batch-block size -------------------------------------------------
    bt_cap = bt_max
    if B >= 2:
        # Guarantee >= 2 batch blocks so the "parallel" axis can feed megacore.
        bt_cap = min(bt_cap, max(1, B // 2))
    # Guard the VMEM budget: even the minimal spatial tile must fit tile_bytes.
    per_bt_bytes = (HW * C * itemsize) if channels_last else (C * itemsize * 128)
    bt_cap = min(bt_cap, max(1, tile_bytes // max(1, per_bt_bytes)))
    Bt = _largest_divisor_leq(B, max(1, bt_cap))
    nb = B // Bt

    # --- spatial tiling / layout -------------------------------------------
    if channels_last:
        hw_tile = HW
        n_k = 1
        # Layout plumbing (cheap in this small-HW regime): (B, C, HW) -> (B, HW, C).
        x_blocked = x.reshape(B, C, HW).transpose(0, 2, 1).reshape(nb, Bt, HW, C)
        block_shape = (1, Bt, HW, C)
        in_x_spec = pl.BlockSpec(block_shape, lambda b, k: (b, 0, 0, 0))
    else:
        # Lane-aligned (multiple of 128) spatial tile, or full HW if it fits.
        max_lanes = max(128, (tile_bytes // max(1, Bt * C * itemsize)) // 128 * 128)
        hw_tile = HW if HW <= max_lanes else max_lanes
        n_k = pl.cdiv(HW, hw_tile)
        x_blocked = x.reshape(nb, Bt, C, HW)
        block_shape = (1, Bt, C, hw_tile)
        in_x_spec = pl.BlockSpec(block_shape, lambda b, k: (b, 0, 0, k))

    block_bytes = int(np.prod(block_shape)) * itemsize
    # Explicit VMEM budget: 2 pipeline buffers for x + weights/out/scratch headroom.
    vmem_limit = int(min(64 * 1024 * 1024,
                         max(16 * 1024 * 1024, 2 * block_bytes + 4 * 1024 * 1024)))

    out_dtype = x.dtype
    kernel = functools.partial(_channel_attention_kernel, hw=HW, hw_tile=hw_tile,
                               channels_last=channels_last)

    cost = pl.CostEstimate(
        flops=int(2 * B * C * HW + 2 * (2 * B) * C * Cr * 2),
        transcendentals=int(B * C),
        bytes_accessed=int(B * C * HW * itemsize
                           + 2 * C * Cr * jnp.dtype(w1.dtype).itemsize
                           + B * C * jnp.dtype(out_dtype).itemsize),
    )

    out = pl.pallas_call(
        kernel,
        out_shape=jax.ShapeDtypeStruct((nb, Bt, C), out_dtype),
        grid_spec=pltpu.PrefetchScalarGridSpec(
            num_scalar_prefetch=0,
            grid=(nb, n_k),
            in_specs=[
                in_x_spec,
                pl.BlockSpec((Cr, C), lambda b, k: (0, 0)),
                pl.BlockSpec((C, Cr), lambda b, k: (0, 0)),
            ],
            out_specs=pl.BlockSpec((1, Bt, C), lambda b, k: (b, 0, 0)),
            scratch_shapes=[
                pltpu.VMEM((Bt, C), jnp.float32),   # running sum
                pltpu.VMEM((Bt, C), jnp.float32),   # running max
            ],
        ),
        compiler_params=pltpu.CompilerParams(
            dimension_semantics=("parallel", "arbitrary"),
            vmem_limit_bytes=vmem_limit),
        cost_estimate=cost,
    )(x_blocked, w1, w2)

    return out.reshape(B, C, 1, 1)


def _reference(x, w1, w2):
    # Pure-JAX reference mirroring the PyTorch forward exactly.
    avg = jnp.mean(x, axis=(2, 3))  # (B, C)
    mx = jnp.max(x, axis=(2, 3))    # (B, C)

    def branch(p):
        h = jnp.maximum(p @ w1.T, 0.0)  # (B, Cr)
        return h @ w2.T                 # (B, C)

    out = jax.nn.sigmoid(branch(avg) + branch(mx))
    return out[:, :, None, None]


def _run_case(key, B, C, H, W, reduction, dtype=jnp.float32, **kw):
    Cr = max(1, C // reduction)
    kx, k1, k2 = jax.random.split(key, 3)
    x = jax.random.normal(kx, (B, C, H, W), dtype=dtype)
    w1 = jax.random.normal(k1, (Cr, C), dtype=dtype) * 0.1   # fc1: C -> C//r
    w2 = jax.random.normal(k2, (C, Cr), dtype=dtype) * 0.1   # fc2: C//r -> C

    out = jax.block_until_ready(channel_attention(x, w1, w2, **kw))
    ref = jax.block_until_ready(_reference(x, w1, w2))
    assert out.shape == (B, C, 1, 1), out.shape
    np.testing.assert_allclose(np.asarray(out), np.asarray(ref),
                               rtol=1e-4, atol=1e-5)


if __name__ == "__main__":
    key = jax.random.PRNGKey(0)
    k0, k1, k2 = jax.random.split(key, 3)

    # 1) Primary case: channel-major path, single full spatial tile.
    _run_case(k0, B=2, C=64, H=8, W=8, reduction=16)

    # 2) Channel-last fast path: small spatial map (7x7) with lane-friendly C.
    _run_case(k1, B=3, C=128, H=7, W=7, reduction=16)

    # 3) Multi-tile spatial reduction with a partial (masked) last tile.
    _run_case(k2, B=2, C=8, H=16, W=20, reduction=4, tile_bytes=4096)

    print("KERNEL_OK")
</pallas_src>

<mosaic_0001>
module attributes {stable_mosaic.version = 11 : i64} {
  func.func @_channel_attention_kernel(%arg0: i32, %arg1: i32, %arg2: memref<1x1x64x64xf32, #tpu.memory_space<vmem>>, %arg3: memref<4x64xf32, #tpu.memory_space<vmem>>, %arg4: memref<64x4xf32, #tpu.memory_space<vmem>>, %arg5: memref<1x1x64xf32, #tpu.memory_space<vmem>>, %arg6: memref<1x64xf32, #tpu.memory_space<vmem>>, %arg7: memref<1x64xf32, #tpu.memory_space<vmem>>) attributes {dimension_semantics = [#tpu.dimension_semantics<parallel>, #tpu.dimension_semantics<arbitrary>], iteration_bounds = array<i64: 2, 1>, scalar_prefetch = 0 : i64, scratch_operands = 2 : i64, tpu.core_type = #tpu.core_type<tc>, window_params = [{transform_indices = @transform_0, window_bounds = array<i64: 1, 1, 64, 64>}, {pipeline_mode = #tpu.pipeline_mode<synchronous>, transform_indices = @transform_1, window_bounds = array<i64: 4, 64>}, {pipeline_mode = #tpu.pipeline_mode<synchronous>, transform_indices = @transform_2, window_bounds = array<i64: 64, 4>}, {transform_indices = @transform_3, window_bounds = array<i64: 1, 1, 64>}]} {
    %c0 = arith.constant 0 : index
    %c0_0 = arith.constant 0 : index
    %c0_1 = arith.constant 0 : index
    %c0_2 = arith.constant 0 : index
    %0 = vector.load %arg2[%c0, %c0_0, %c0_1, %c0_2] : memref<1x1x64x64xf32, #tpu.memory_space<vmem>>, vector<1x1x64x64xf32>
    %1 = vector.shape_cast %0 : vector<1x1x64x64xf32> to vector<1x64x64xf32>
    %c0_i32 = arith.constant 0 : i32
    %2 = arith.cmpi eq, %arg1, %c0_i32 : i32
    %3 = arith.extui %2 : i1 to i32
    %c0_i32_3 = arith.constant 0 : i32
    %4 = arith.cmpi ne, %3, %c0_i32_3 : i32
    scf.if %4 {
      %cst_15 = arith.constant 0.000000e+00 : f32
      %16 = vector.broadcast %cst_15 : f32 to vector<1x64xf32>
      %c0_16 = arith.constant 0 : index
      %c0_17 = arith.constant 0 : index
      %17 = vector.load %arg6[%c0_16, %c0_17] : memref<1x64xf32, #tpu.memory_space<vmem>>, vector<1x64xf32>
      tpu.vector_store %arg6[%c0_16, %c0_17], %16 {strides = array<i32>} : memref<1x64xf32, #tpu.memory_space<vmem>>, vector<1x64xf32>,
      %cst_18 = arith.constant 0xFF800000 : f32
      %18 = vector.broadcast %cst_18 : f32 to vector<1x64xf32>
      %c0_19 = arith.constant 0 : index
      %c0_20 = arith.constant 0 : index
      %19 = vector.load %arg7[%c0_19, %c0_20] : memref<1x64xf32, #tpu.memory_space<vmem>>, vector<1x64xf32>
      tpu.vector_store %arg7[%c0_19, %c0_20], %18 {strides = array<i32>} : memref<1x64xf32, #tpu.memory_space<vmem>>, vector<1x64xf32>,
    } else {
    }
    %c0_4 = arith.constant 0 : index
    %c0_5 = arith.constant 0 : index
    %5 = vector.load %arg6[%c0_4, %c0_5] : memref<1x64xf32, #tpu.memory_space<vmem>>, vector<1x64xf32>
    %cst = arith.constant dense<0.000000e+00> : vector<1x64xf32>
    %6 = vector.multi_reduction <add>, %1, %cst [2] : vector<1x64x64xf32> to vector<1x64xf32>
    %7 = arith.addf %5, %6 : vector<1x64xf32>
    %c0_6 = arith.constant 0 : index
    %c0_7 = arith.constant 0 : index
    %8 = vector.load %arg6[%c0_6, %c0_7] : memref<1x64xf32, #tpu.memory_space<vmem>>, vector<1x64xf32>
    tpu.vector_store %arg6[%c0_6, %c0_7], %7 {strides = array<i32>} : memref<1x64xf32, #tpu.memory_space<vmem>>, vector<1x64xf32>,
    %c0_8 = arith.constant 0 : index
    %c0_9 = arith.constant 0 : index
    %9 = vector.load %arg7[%c0_8, %c0_9] : memref<1x64xf32, #tpu.memory_space<vmem>>, vector<1x64xf32>
    %cst_10 = arith.constant dense<0xFF800000> : vector<1x64xf32>
    %10 = vector.multi_reduction <maximumf>, %1, %cst_10 [2] : vector<1x64x64xf32> to vector<1x64xf32>
    %11 = arith.maximumf %9, %10 : vector<1x64xf32>
    %c0_11 = arith.constant 0 : index
    %c0_12 = arith.constant 0 : index
    %12 = vector.load %arg7[%c0_11, %c0_12] : memref<1x64xf32, #tpu.memory_space<vmem>>, vector<1x64xf32>
    tpu.vector_store %arg7[%c0_11, %c0_12], %11 {strides = array<i32>} : memref<1x64xf32, #tpu.memory_space<vmem>>, vector<1x64xf32>,
    %c0_i32_13 = arith.constant 0 : i32
    %13 = arith.cmpi eq, %arg1, %c0_i32_13 : i32
    %14 = arith.extui %13 : i1 to i32
    %c0_i32_14 = arith.constant 0 : i32
    %15 = arith.cmpi ne, %14, %c0_i32_14 : i32
    scf.if %15 {
      %c0_15 = arith.constant 0 : index
      %c0_16 = arith.constant 0 : index
      %16 = vector.load %arg6[%c0_15, %c0_16] : memref<1x64xf32, #tpu.memory_space<vmem>>, vector<1x64xf32>
      %cst_17 = arith.constant 1.562500e-02 : f32
      %17 = vector.broadcast %cst_17 : f32 to vector<1x64xf32>
      %18 = arith.mulf %16, %17 : vector<1x64xf32>
      %c0_18 = arith.constant 0 : index
      %c0_19 = arith.constant 0 : index
      %19 = vector.load %arg7[%c0_18, %c0_19] : memref<1x64xf32, #tpu.memory_space<vmem>>, vector<1x64xf32>
      %20 = tpu.concatenate %18, %19 in 0 : vector<1x64xf32>, vector<1x64xf32> -> vector<2x64xf32>
      %c0_20 = arith.constant 0 : index
      %c0_21 = arith.constant 0 : index
      %21 = vector.load %arg3[%c0_20, %c0_21] : memref<4x64xf32, #tpu.memory_space<vmem>>, vector<4x64xf32>
      %c0_22 = arith.constant 0 : index
      %c0_23 = arith.constant 0 : index
      %22 = vector.load %arg4[%c0_22, %c0_23] : memref<64x4xf32, #tpu.memory_space<vmem>>, vector<64x4xf32>
      %cst_24 = arith.constant dense<0.000000e+00> : vector<2x4xf32>
      %23 = tpu.matmul %20, %21, %cst_24 {dimension_numbers = #tpu.dot_dimension_numbers<[1], [1], [0], [0], [0, 0, 1, 0], [], []>} : vector<2x64xf32>, vector<4x64xf32>, vector<2x4xf32> -> vector<2x4xf32>
      %cst_25 = arith.constant 0.000000e+00 : f32
      %24 = vector.broadcast %cst_25 : f32 to vector<2x4xf32>
      %25 = arith.maximumf %23, %24 : vector<2x4xf32>
      %cst_26 = arith.constant dense<0.000000e+00> : vector<2x64xf32>
      %26 = tpu.matmul %25, %22, %cst_26 {dimension_numbers = #tpu.dot_dimension_numbers<[1], [1], [0], [0], [0, 0, 1, 0], [], []>} : vector<2x4xf32>, vector<64x4xf32>, vector<2x64xf32> -> vector<2x64xf32>
      %27 = vector.extract_strided_slice %26 {offsets = [0, 0], sizes = [1, 64], strides = [1, 1]} : vector<2x64xf32> to vector<1x64xf32>
      %28 = vector.extract_strided_slice %26 {offsets = [1, 0], sizes = [1, 64], strides = [1, 1]} : vector<2x64xf32> to vector<1x64xf32>
      %29 = arith.addf %27, %28 : vector<1x64xf32>
      %30 = arith.negf %29 : vector<1x64xf32>
      %31 = math.exp %30 : vector<1x64xf32>
      %cst_27 = arith.constant 1.000000e+00 : f32
      %32 = vector.broadcast %cst_27 : f32 to vector<1x64xf32>
      %33 = arith.addf %32, %31 : vector<1x64xf32>
      %34 = arith.divf %32, %33 : vector<1x64xf32>
      %c0_28 = arith.constant 0 : index
      %c0_29 = arith.constant 0 : index
      %c0_30 = arith.constant 0 : index
      %35 = vector.load %arg5[%c0_28, %c0_29, %c0_30] : memref<1x1x64xf32, #tpu.memory_space<vmem>>, vector<1x1x64xf32>
      %36 = vector.shape_cast %35 : vector<1x1x64xf32> to vector<1x64xf32>
      %37 = vector.shape_cast %34 : vector<1x64xf32> to vector<1x1x64xf32>
      tpu.vector_store %arg5[%c0_28, %c0_29, %c0_30], %37 {strides = array<i32>} : memref<1x1x64xf32, #tpu.memory_space<vmem>>, vector<1x1x64xf32>,
    } else {
    }
    return
  }
  func.func @transform_0(%arg0: i32, %arg1: i32) -> (i32, i32, i32, i32) {
    %c0_i32 = arith.constant 0 : i32
    %c0_i32_0 = arith.constant 0 : i32
    %c0_i32_1 = arith.constant 0 : i32
    return %arg0, %c0_i32, %c0_i32_0, %arg1 : i32, i32, i32, i32
  }
  func.func @transform_1(%arg0: i32, %arg1: i32) -> (i32, i32) {
    %c0_i32 = arith.constant 0 : i32
    %c0_i32_0 = arith.constant 0 : i32
    %c0_i32_1 = arith.constant 0 : i32
    return %c0_i32, %c0_i32_0 : i32, i32
  }
  func.func @transform_2(%arg0: i32, %arg1: i32) -> (i32, i32) {
    %c0_i32 = arith.constant 0 : i32
    %c0_i32_0 = arith.constant 0 : i32
    %c0_i32_1 = arith.constant 0 : i32
    return %c0_i32, %c0_i32_0 : i32, i32
  }
  func.func @transform_3(%arg0: i32, %arg1: i32) -> (i32, i32, i32) {
    %c0_i32 = arith.constant 0 : i32
    %c0_i32_0 = arith.constant 0 : i32
    %c0_i32_1 = arith.constant 0 : i32
    return %arg0, %c0_i32, %c0_i32_0 : i32, i32, i32
  }
}

</mosaic_0001>

<llo_original>
// kernel: channel_attention.1
$region0: #{channel_attention.1}
  #allocation0 [shape = 'u32[]', space=smem, size = 0x4, offset = 0x4, fixed_abs, tag = 'smem constant byte address 0x4 - core index']
  #allocation1 [shape = 'u32[144,128]{1,0:T(1,128)}', space=vmem, size = 0x12000, scoped, tag = 'internal scratch']
  #allocation2 [shape = 'f32[1,64]{1,0:T(1,128)}', space=vmem, size = 0x200, scoped, tag = 'scratch operand']
  #allocation3 [shape = 'f32[1,64]{1,0:T(1,128)}', space=vmem, size = 0x200, scoped, tag = 'scratch operand']
  %s0 = inlined_call_operand.vmem [shape: f32[2,1,64,64], index: 0, kind: input, shape index: {}]
  %s1 = inlined_call_operand.vmem [shape: f32[4,64], index: 1, kind: input, shape index: {}]
  %s2 = inlined_call_operand.vmem [shape: f32[64,4], index: 2, kind: input, shape index: {}]
  %s3 = inlined_call_operand.hbm [shape: f32[2,1,64], index: 3, kind: output, shape index: {}]
  %s4 = sld [smem:[#allocation0]]
  $region53: #{channel_attention.1} parent=0
    _
  %s6 = ssub.s32 1, %s4
  %s7 = scalar_select 0, %s6, %s4
  $region1: #{channel_attention.1} parent=0
    #allocation4 [shape = 'u8[1024]{0}', space=vmem, size = 0x400, scoped, tag = 'output window, operand 0']
    #allocation5 [shape = 's32[2]{0}', space=sflag, size = 0x8, scoped, tag = 'scoped memory for channel_attention.1']
    %8 = vsyncpa [#allocation5], 0
    %s9 = scalar_lea.sflag [#allocation5], 1
    %10 = vsyncpa %s9, 0
    loop: start=0, step=1, limit=4
    $region2: #{channel_attention.1} parent=1 // loop_pre_header
      _
    $region3: #{channel_attention.1} parent=1 // loop_header
      %s12 = sphi 0, %s16
      %p13 = scmp.ge.s32.totalorder %s12, 4
      %s19 = sphi 0, %s31
      %s20 = sphi 0, %s27
      %s21 = sphi 0, %s19
      %s22 = sphi 0, %s20
      %s23 = sphi 0, %s21
      %s24 = sphi 0, %s22
      %s36 = sphi 0, %s38
      %s39 = sphi 0, %s36
      %s40 = sphi 0, %s39
      %s56 = sphi 0, %s40
      %s60 = sphi 0, %s60
      %s62 = sphi 0, %s60
      %s63 = sphi 0, %s62
      %s77 = sphi 0, %s63
      %s81 = sphi 0, %s81
      %s83 = sphi 0, %s81
      %s84 = sphi 0, %s83
      %s98 = sphi 0, %s84
      %s104 = sphi 0, %s106
      %s107 = sphi 0, %s104
      %s108 = sphi 0, %s107
      %s124 = sphi 0, %s108
    $region4: #{channel_attention.1} parent=1 // loop_header_branch
      %15 = sbr.rel (%p13) target = $region8
    $region5: #{channel_attention.1} parent=1 // loop_body
      %s17 = ssub.s32 %s12, 1
      %s18 = ssub.s32 %s12, 2
      %s25 = sadd.s32 1, %s20
      %p26 = scmp.ge.s32.totalorder %s25, 1
      %s27 = scalar_select %p26, 0, %s25
      %s28 = sadd.s32 1, %s19
      %s29 = scalar_select %p26, %s28, %s19
      %p30 = scmp.ge.s32.totalorder %s29, 2
      %s31 = scalar_select %p30, 0, %s29
      %s32 = ssub.s32 %s19, %s31
      %s33 = ssub.s32 %s20, %s27
      %s34 = sor.u32 %s32, %s33
      %p35 = scmp.eq.s32.totalorder %s34, 0
      %s37 = sadd.s32 %s36, 1
      %s38 = scalar_select %p35, %s36, %s37
      %p41 = pneg %p35
      %p42 = scmp.eq.s32.totalorder %s12, 1
      %p43 = por %p41, %p42
      %p44 = scmp.ne.s32.totalorder %s36, %s39
      %p45 = scmp.eq.s32.totalorder %s12, 0
      %p46 = por %p44, %p45
      %p47 = scmp.ne.s32.totalorder %s36, %s39
      %p48 = scmp.eq.s32.totalorder %s17, 1
      %p49 = por %p47, %p48
      %p50 = scmp.ne.s32.totalorder %s39, %s40
      %p51 = scmp.eq.s32.totalorder %s17, 0
      %p52 = por %p50, %p51
      %p53 = scmp.ne.s32.totalorder %s39, %s40
      %p54 = scmp.eq.s32.totalorder %s18, 1
      %p55 = por %p53, %p54
      %p57 = scmp.ne.s32.totalorder %s40, %s56
      %p58 = scmp.eq.s32.totalorder %s18, 0
      %p59 = por %p57, %p58
      %s61 = sadd.s32 %s60, 1
      %p64 = scmp.eq.s32.totalorder %s12, 1
      %p65 = scmp.ne.s32.totalorder %s60, %s62
      %p66 = scmp.eq.s32.totalorder %s12, 0
      %p67 = por %p65, %p66
      %p68 = scmp.ne.s32.totalorder %s60, %s62
      %p69 = scmp.eq.s32.totalorder %s17, 1
      %p70 = por %p68, %p69
      %p71 = scmp.ne.s32.totalorder %s62, %s63
      %p72 = scmp.eq.s32.totalorder %s17, 0
      %p73 = por %p71, %p72
      %p74 = scmp.ne.s32.totalorder %s62, %s63
      %p75 = scmp.eq.s32.totalorder %s18, 1
      %p76 = por %p74, %p75
      %p78 = scmp.ne.s32.totalorder %s63, %s77
      %p79 = scmp.eq.s32.totalorder %s18, 0
      %p80 = por %p78, %p79
      %s82 = sadd.s32 %s81, 1
      %p85 = scmp.eq.s32.totalorder %s12, 1
      %p86 = scmp.ne.s32.totalorder %s81, %s83
      %p87 = scmp.eq.s32.totalorder %s12, 0
      %p88 = por %p86, %p87
      %p89 = scmp.ne.s32.totalorder %s81, %s83
      %p90 = scmp.eq.s32.totalorder %s17, 1
      %p91 = por %p89, %p90
      %p92 = scmp.ne.s32.totalorder %s83, %s84
      %p93 = scmp.eq.s32.totalorder %s17, 0
      %p94 = por %p92, %p93
      %p95 = scmp.ne.s32.totalorder %s83, %s84
      %p96 = scmp.eq.s32.totalorder %s18, 1
      %p97 = por %p95, %p96
      %p99 = scmp.ne.s32.totalorder %s84, %s98
      %p100 = scmp.eq.s32.totalorder %s18, 0
      %p101 = por %p99, %p100
      %s102 = ssub.s32 %s19, %s31
      %p103 = scmp.eq.s32.totalorder %s102, 0
      %s105 = sadd.s32 %s104, 1
      %s106 = scalar_select %p103, %s104, %s105
      %p109 = pneg %p103
      %p110 = scmp.eq.s32.totalorder %s12, 1
      %p111 = por %p109, %p110
      %p112 = scmp.ne.s32.totalorder %s104, %s107
      %p113 = scmp.eq.s32.totalorder %s12, 0
      %p114 = por %p112, %p113
      %p115 = scmp.ne.s32.totalorder %s104, %s107
      %p116 = scmp.eq.s32.totalorder %s17, 1
      %p117 = por %p115, %p116
      %p118 = scmp.ne.s32.totalorder %s107, %s108
      %p119 = scmp.eq.s32.totalorder %s17, 0
      %p120 = por %p118, %p119
      %p121 = scmp.ne.s32.totalorder %s107, %s108
      %p122 = scmp.eq.s32.totalorder %s18, 1
      %p123 = por %p121, %p122
      %p125 = scmp.ne.s32.totalorder %s108, %s124
      %p126 = scmp.eq.s32.totalorder %s18, 0
      %p127 = por %p125, %p126
      %p128 = scmp.le.s32.totalorder 1, %s12
      %p129 = scmp.lt.s32.totalorder %s12, 3
      %p130 = pnand %p128, %p129
      %p131 = pneg %p130
      // Predicated region
      $region9: #{channel_attention.1} parent=5 // pred_check
        _
      $region10: #{channel_attention.1} parent=5 // pred_check_branch
        %133 = sbr.rel (%p130) target = $region12
      $region11: #{channel_attention.1} parent=5 // pred_region
        %s134 = ssub.s32 %s12, 1
        // Predicated region
        $region13: #{channel_attention.1} parent=11 // pred_check
          %p135 = pneg %p73
        $region14: #{channel_attention.1} parent=11 // pred_check_branch
          %137 = sbr.rel (%p135) target = $region16
        $region15: #{channel_attention.1} parent=11 // pred_region
          _
        $region16: #{channel_attention.1} parent=11 // pred_fallthru
          _
        // Predicated region
        $region17: #{channel_attention.1} parent=11 // pred_check
          %p138 = pneg %p94
        $region18: #{channel_attention.1} parent=11 // pred_check_branch
          %140 = sbr.rel (%p138) target = $region20
        $region19: #{channel_attention.1} parent=11 // pred_region
          _
        $region20: #{channel_attention.1} parent=11 // pred_fallthru
          _
      $region12: #{channel_attention.1} parent=5 // pred_fallthru
        _
      %p141 = scmp.lt.s32.totalorder %s12, 2
      // Predicated region
      $region21: #{channel_attention.1} parent=5 // pred_check
        %p142 = pneg %p141
      $region22: #{channel_attention.1} parent=5 // pred_check_branch
        %144 = sbr.rel (%p142) target = $region24
      $region23: #{channel_attention.1} parent=5 // pred_region
        // Predicated region
        $region25: #{channel_attention.1} parent=23 // pred_check
          %p145 = pneg %p46
        $region26: #{channel_attention.1} parent=23 // pred_check_branch
          %147 = sbr.rel (%p145) target = $region28
        $region27: #{channel_attention.1} parent=23 // pred_region
          %p148 = scmp.lt.s32.totalorder %s19, 1
          %s149 = scalar_select %p148, %s19, 1
          %p150 = scmp.lt.s32.totalorder %s20, 0
          %s151 = scalar_select %p150, %s20, 0
          %s152 = smul.addr %s149, 8
          %s153 = sadd.s32 %s151, %s152
          %s154 = smul.addr %s153, 8
          %s155 = scalar_lea.vmem %s0, %s154
        $region28: #{channel_attention.1} parent=23 // pred_fallthru
          _
      $region24: #{channel_attention.1} parent=5 // pred_fallthru
        _
      %p156 = scmp.le.s32.totalorder 1, %s12
      %p157 = scmp.lt.s32.totalorder %s12, 3
      %p158 = pnand %p156, %p157
      %p159 = pneg %p158
      // Predicated region
      $region29: #{channel_attention.1} parent=5 // pred_check
        _
      $region30: #{channel_attention.1} parent=5 // pred_check_branch
        %161 = sbr.rel (%p158) target = $region32
      $region31: #{channel_attention.1} parent=5 // pred_region
        %s162 = ssub.s32 %s12, 1
        %p163 = scmp.lt.s32.totalorder %s21, 1
        %s164 = scalar_select %p163, %s21, 1
        %p165 = scmp.lt.s32.totalorder %s22, 0
        %s166 = scalar_select %p165, %s22, 0
        %s167 = smul.addr %s164, 8
        %s168 = sadd.s32 %s166, %s167
        %s169 = smul.addr %s168, 8
        %s170 = scalar_lea.vmem %s0, %s169
        %p171 = pneg %p52
        %p172 = pneg %p49
        %p173 = pneg %p73
        %p174 = pneg %p70
        %p175 = pneg %p94
        %p176 = pneg %p91
        %p177 = pneg %p120
        %p178 = pneg %p117
        %s179 = sand.u32 %s107, 1
        %s180 = scalar_lea.sflag [#allocation5], %s179
        %s181 = sand.u32 %s107, 1
        %s182 = scalar_lea.vmem [#allocation4], %s181
        %p183 = scmp.lt.s32.totalorder %s21, 1
        %s184 = scalar_select %p183, %s21, 1
        %p185 = scmp.lt.s32.totalorder %s22, 0
        %s186 = scalar_select %p185, %s22, 0
        %s187 = smul.addr %s184, 8
        %s188 = sadd.s32 %s186, %s187
        %s189 = smul.addr %s188, 8
        %s190 = scalar_lea.vmem %s0, %s189
        %v191 = vld [vmem:[%s190] sm:$0xff]
        %v192 = vld [vmem:[%s190 + $0x8] sm:$0xff]
        %v193 = vld [vmem:[%s190 + $0x10] sm:$0xff]
        %v194 = vld [vmem:[%s190 + $0x18] sm:$0xff]
        %v195 = vld [vmem:[%s190 + $0x20] sm:$0xff]
        %v196 = vld [vmem:[%s190 + $0x28] sm:$0xff]
        %v197 = vld [vmem:[%s190 + $0x30] sm:$0xff]
        %v198 = vld [vmem:[%s190 + $0x38] sm:$0xff]
        %p199 = scmp.eq.s32.totalorder %s22, 0
        // Predicated region
        $region33: #{channel_attention.1} parent=31 // pred_check
          %p200 = pneg %p199
        $region34: #{channel_attention.1} parent=31 // pred_check_branch
          %202 = sbr.rel (%p200) target = $region36
        $region35: #{channel_attention.1} parent=31 // pred_region
          %vm203 = vcmask 516096
          %204 = vst.msk [vmem:[#allocation2] sm:$0x1] %vm203, 0.0
          %205 = vst.msk [vmem:[#allocation3] sm:$0x1] %vm203, -inf
        $region36: #{channel_attention.1} parent=31 // pred_fallthru
          _
        %v206 = vld [vmem:[#allocation2] sm:$0x1]
        %vm207 = vcmask 523264
        %v208 = vsel %vm207, %v191, 0.0
        %209 = vadd.xlane.f32.xlu0 %v208
        %v210 = vpop.xlane.xlu0 %209
        %v211 = vsel %vm207, %v192, 0.0
        %212 = vadd.xlane.f32.xlu0 %v211
        %v213 = vpop.xlane.xlu0 %212
        %v214 = vsel %vm207, %v193, 0.0
        %215 = vadd.xlane.f32.xlu0 %v214
        %v216 = vpop.xlane.xlu0 %215
        %v217 = vsel %vm207, %v194, 0.0
        %218 = vadd.xlane.f32.xlu0 %v217
        %v219 = vpop.xlane.xlu0 %218
        %v220 = vsel %vm207, %v195, 0.0
        %221 = vadd.xlane.f32.xlu0 %v220
        %v222 = vpop.xlane.xlu0 %221
        %v223 = vsel %vm207, %v196, 0.0
        %224 = vadd.xlane.f32.xlu0 %v223
        %v225 = vpop.xlane.xlu0 %224
        %v226 = vsel %vm207, %v197, 0.0
        %227 = vadd.xlane.f32.xlu0 %v226
        %v228 = vpop.xlane.xlu0 %227
        %v229 = vsel %vm207, %v198, 0.0
        %230 = vadd.xlane.f32.xlu0 %v229
        %v231 = vpop.xlane.xlu0 %230
        %v240 = vlaneseq
        %v241 = vshrl.u32 %v240, 7
        %v242 = vsub.s32 0, %v241
        %v243 = vrot.slane %v210, %v242
        %v244 = vlaneseq
        %v245 = vshrl.u32 %v244, 7
        %v246 = vsub.s32 1, %v245
        %v247 = vrot.slane %v210, %v246
        %v248 = vlaneseq
        %v249 = vshrl.u32 %v248, 7
        %v250 = vsub.s32 2, %v249
        %v251 = vrot.slane %v210, %v250
        %v252 = vlaneseq
        %v253 = vshrl.u32 %v252, 7
        %v254 = vsub.s32 3, %v253
        %v255 = vrot.slane %v210, %v254
        %v256 = vlaneseq
        %v257 = vshrl.u32 %v256, 7
        %v258 = vsub.s32 4, %v257
        %v259 = vrot.slane %v210, %v258
        %v260 = vlaneseq
        %v261 = vshrl.u32 %v260, 7
        %v262 = vsub.s32 5, %v261
        %v263 = vrot.slane %v210, %v262
        %v264 = vlaneseq
        %v265 = vshrl.u32 %v264, 7
        %v266 = vsub.s32 6, %v265
        %v267 = vrot.slane %v210, %v266
        %v268 = vlaneseq
        %v269 = vshrl.u32 %v268, 7
        %v270 = vsub.s32 7, %v269
        %v271 = vrot.slane %v210, %v270
        %v272 = vlaneseq
        %v273 = vshrl.u32 %v272, 7
        %v274 = vsub.s32 0, %v273
        %v275 = vrot.slane %v213, %v274
        %v276 = vlaneseq
        %v277 = vshrl.u32 %v276, 7
        %v278 = vsub.s32 1, %v277
        %v279 = vrot.slane %v213, %v278
        %v280 = vlaneseq
        %v281 = vshrl.u32 %v280, 7
        %v282 = vsub.s32 2, %v281
        %v283 = vrot.slane %v213, %v282
        %v284 = vlaneseq
        %v285 = vshrl.u32 %v284, 7
        %v286 = vsub.s32 3, %v285
        %v287 = vrot.slane %v213, %v286
        %v288 = vlaneseq
        %v289 = vshrl.u32 %v288, 7
        %v290 = vsub.s32 4, %v289
        %v291 = vrot.slane %v213, %v290
        %v292 = vlaneseq
        %v293 = vshrl.u32 %v292, 7
        %v294 = vsub.s32 5, %v293
        %v295 = vrot.slane %v213, %v294
        %v296 = vlaneseq
        %v297 = vshrl.u32 %v296, 7
        %v298 = vsub.s32 6, %v297
        %v299 = vrot.slane %v213, %v298
        %v300 = vlaneseq
        %v301 = vshrl.u32 %v300, 7
        %v302 = vsub.s32 7, %v301
        %v303 = vrot.slane %v213, %v302
        %v304 = vlaneseq
        %v305 = vshrl.u32 %v304, 7
        %v306 = vsub.s32 0, %v305
        %v307 = vrot.slane %v216, %v306
        %v308 = vlaneseq
        %v309 = vshrl.u32 %v308, 7
        %v310 = vsub.s32 1, %v309
        %v311 = vrot.slane %v216, %v310
        %v312 = vlaneseq
        %v313 = vshrl.u32 %v312, 7
        %v314 = vsub.s32 2, %v313
        %v315 = vrot.slane %v216, %v314
        %v316 = vlaneseq
        %v317 = vshrl.u32 %v316, 7
        %v318 = vsub.s32 3, %v317
        %v319 = vrot.slane %v216, %v318
        %v320 = vlaneseq
        %v321 = vshrl.u32 %v320, 7
        %v322 = vsub.s32 4, %v321
        %v323 = vrot.slane %v216, %v322
        %v324 = vlaneseq
        %v325 = vshrl.u32 %v324, 7
        %v326 = vsub.s32 5, %v325
        %v327 = vrot.slane %v216, %v326
        %v328 = vlaneseq
        %v329 = vshrl.u32 %v328, 7
        %v330 = vsub.s32 6, %v329
        %v331 = vrot.slane %v216, %v330
        %v332 = vlaneseq
        %v333 = vshrl.u32 %v332, 7
        %v334 = vsub.s32 7, %v333
        %v335 = vrot.slane %v216, %v334
        %v336 = vlaneseq
        %v337 = vshrl.u32 %v336, 7
        %v338 = vsub.s32 0, %v337
        %v339 = vrot.slane %v219, %v338
        %v340 = vlaneseq
        %v341 = vshrl.u32 %v340, 7
        %v342 = vsub.s32 1, %v341
        %v343 = vrot.slane %v219, %v342
        %v344 = vlaneseq
        %v345 = vshrl.u32 %v344, 7
        %v346 = vsub.s32 2, %v345
        %v347 = vrot.slane %v219, %v346
        %v348 = vlaneseq
        %v349 = vshrl.u32 %v348, 7
        %v350 = vsub.s32 3, %v349
        %v351 = vrot.slane %v219, %v350
        %v352 = vlaneseq
        %v353 = vshrl.u32 %v352, 7
        %v354 = vsub.s32 4, %v353
        %v355 = vrot.slane %v219, %v354
        %v356 = vlaneseq
        %v357 = vshrl.u32 %v356, 7
        %v358 = vsub.s32 5, %v357
        %v359 = vrot.slane %v219, %v358
        %v360 = vlaneseq
        %v361 = vshrl.u32 %v360, 7
        %v362 = vsub.s32 6, %v361
        %v363 = vrot.slane %v219, %v362
        %v364 = vlaneseq
        %v365 = vshrl.u32 %v364, 7
        %v366 = vsub.s32 7, %v365
        %v367 = vrot.slane %v219, %v366
        %v368 = vlaneseq
        %v369 = vshrl.u32 %v368, 7
        %v370 = vsub.s32 0, %v369
        %v371 = vrot.slane %v222, %v370
        %v372 = vlaneseq
        %v373 = vshrl.u32 %v372, 7
        %v374 = vsub.s32 1, %v373
        %v375 = vrot.slane %v222, %v374
        %v376 = vlaneseq
        %v377 = vshrl.u32 %v376, 7
        %v378 = vsub.s32 2, %v377
        %v379 = vrot.slane %v222, %v378
        %v380 = vlaneseq
        %v381 = vshrl.u32 %v380, 7
        %v382 = vsub.s32 3, %v381
        %v383 = vrot.slane %v222, %v382
        %v384 = vlaneseq
        %v385 = vshrl.u32 %v384, 7
        %v386 = vsub.s32 4, %v385
        %v387 = vrot.slane %v222, %v386
        %v388 = vlaneseq
        %v389 = vshrl.u32 %v388, 7
        %v390 = vsub.s32 5, %v389
        %v391 = vrot.slane %v222, %v390
        %v392 = vlaneseq
        %v393 = vshrl.u32 %v392, 7
        %v394 = vsub.s32 6, %v393
        %v395 = vrot.slane %v222, %v394
        %v396 = vlaneseq
        %v397 = vshrl.u32 %v396, 7
        %v398 = vsub.s32 7, %v397
        %v399 = vrot.slane %v222, %v398
        %v400 = vlaneseq
        %v401 = vshrl.u32 %v400, 7
        %v402 = vsub.s32 0, %v401
        %v403 = vrot.slane %v225, %v402
        %v404 = vlaneseq
        %v405 = vshrl.u32 %v404, 7
        %v406 = vsub.s32 1, %v405
        %v407 = vrot.slane %v225, %v406
        %v408 = vlaneseq
        %v409 = vshrl.u32 %v408, 7
        %v410 = vsub.s32 2, %v409
        %v411 = vrot.slane %v225, %v410
        %v412 = vlaneseq
        %v413 = vshrl.u32 %v412, 7
        %v414 = vsub.s32 3, %v413
        %v415 = vrot.slane %v225, %v414
        %v416 = vlaneseq
        %v417 = vshrl.u32 %v416, 7
        %v418 = vsub.s32 4, %v417
        %v419 = vrot.slane %v225, %v418
        %v420 = vlaneseq
        %v421 = vshrl.u32 %v420, 7
        %v422 = vsub.s32 5, %v421
        %v423 = vrot.slane %v225, %v422
        %v424 = vlaneseq
        %v425 = vshrl.u32 %v424, 7
        %v426 = vsub.s32 6, %v425
        %v427 = vrot.slane %v225, %v426
        %v428 = vlaneseq
        %v429 = vshrl.u32 %v428, 7
        %v430 = vsub.s32 7, %v429
        %v431 = vrot.slane %v225, %v430
        %v432 = vlaneseq
        %v433 = vshrl.u32 %v432, 7
        %v434 = vsub.s32 0, %v433
        %v435 = vrot.slane %v228, %v434
        %v436 = vlaneseq
        %v437 = vshrl.u32 %v436, 7
        %v438 = vsub.s32 1, %v437
        %v439 = vrot.slane %v228, %v438
        %v440 = vlaneseq
        %v441 = vshrl.u32 %v440, 7
        %v442 = vsub.s32 2, %v441
        %v443 = vrot.slane %v228, %v442
        %v444 = vlaneseq
        %v445 = vshrl.u32 %v444, 7
        %v446 = vsub.s32 3, %v445
        %v447 = vrot.slane %v228, %v446
        %v448 = vlaneseq
        %v449 = vshrl.u32 %v448, 7
        %v450 = vsub.s32 4, %v449
        %v451 = vrot.slane %v228, %v450
        %v452 = vlaneseq
        %v453 = vshrl.u32 %v452, 7
        %v454 = vsub.s32 5, %v453
        %v455 = vrot.slane %v228, %v454
        %v456 = vlaneseq
        %v457 = vshrl.u32 %v456, 7
        %v458 = vsub.s32 6, %v457
        %v459 = vrot.slane %v228, %v458
        %v460 = vlaneseq
        %v461 = vshrl.u32 %v460, 7
        %v462 = vsub.s32 7, %v461
        %v463 = vrot.slane %v228, %v462
        %v464 = vlaneseq
        %v465 = vshrl.u32 %v464, 7
        %v466 = vsub.s32 0, %v465
        %v467 = vrot.slane %v231, %v466
        %v468 = vlaneseq
        %v469 = vshrl.u32 %v468, 7
        %v470 = vsub.s32 1, %v469
        %v471 = vrot.slane %v231, %v470
        %v472 = vlaneseq
        %v473 = vshrl.u32 %v472, 7
        %v474 = vsub.s32 2, %v473
        %v475 = vrot.slane %v231, %v474
        %v476 = vlaneseq
        %v477 = vshrl.u32 %v476, 7
        %v478 = vsub.s32 3, %v477
        %v479 = vrot.slane %v231, %v478
        %v480 = vlaneseq
        %v481 = vshrl.u32 %v480, 7
        %v482 = vsub.s32 4, %v481
        %v483 = vrot.slane %v231, %v482
        %v484 = vlaneseq
        %v485 = vshrl.u32 %v484, 7
        %v486 = vsub.s32 5, %v485
        %v487 = vrot.slane %v231, %v486
        %v488 = vlaneseq
        %v489 = vshrl.u32 %v488, 7
        %v490 = vsub.s32 6, %v489
        %v491 = vrot.slane %v231, %v490
        %v492 = vlaneseq
        %v493 = vshrl.u32 %v492, 7
        %v494 = vsub.s32 7, %v493
        %v495 = vrot.slane %v231, %v494
        %v496 = vcombine.low %v243, %v247
        %v497 = vcombine.low %v251, %v255
        %v498 = vcombine.low %v259, %v263
        %v499 = vcombine.low %v267, %v271
        %v501 = vunpack.c.l.s4 1966171168
        %v502 = vunpack.c.0.s8 %v501
        %v503 = vlaneseq
        %v504 = vshrl.u32 %v503, 7
        %v505 = vsub.s32 %v502, %v504
        %v506 = vrot.slane %v496, %v505
        %v508 = vunpack.c.l.s4 1966171168
        %v509 = vunpack.c.0.s8 %v508
        %v510 = vlaneseq
        %v511 = vshrl.u32 %v510, 7
        %v512 = vsub.s32 %v509, %v511
        %v513 = vrot.slane %v497, %v512
        %v515 = vunpack.c.l.s4 1966171168
        %v516 = vunpack.c.0.s8 %v515
        %v517 = vlaneseq
        %v518 = vshrl.u32 %v517, 7
        %v519 = vsub.s32 %v516, %v518
        %v520 = vrot.slane %v498, %v519
        %v522 = vunpack.c.l.s4 1966171168
        %v523 = vunpack.c.0.s8 %v522
        %v524 = vlaneseq
        %v525 = vshrl.u32 %v524, 7
        %v526 = vsub.s32 %v523, %v525
        %v527 = vrot.slane %v499, %v526
        %v528 = vcombine.low %v506, %v513
        %v529 = vcombine.low %v520, %v527
        %v531 = vunpack.c.l.s4 1966171168
        %v532 = vunpack.c.0.s8 %v531
        %v533 = vlaneseq
        %v534 = vshrl.u32 %v533, 7
        %v535 = vsub.s32 %v532, %v534
        %v536 = vrot.slane %v528, %v535
        %v538 = vunpack.c.l.s4 1966171168
        %v539 = vunpack.c.0.s8 %v538
        %v540 = vlaneseq
        %v541 = vshrl.u32 %v540, 7
        %v542 = vsub.s32 %v539, %v541
        %v543 = vrot.slane %v529, %v542
        %v544 = vcombine.low %v536, %v543
        %v545 = vcombine.low %v275, %v279
        %v546 = vcombine.low %v283, %v287
        %v547 = vcombine.low %v291, %v295
        %v548 = vcombine.low %v299, %v303
        %v550 = vunpack.c.l.s4 1966171168
        %v551 = vunpack.c.0.s8 %v550
        %v552 = vlaneseq
        %v553 = vshrl.u32 %v552, 7
        %v554 = vsub.s32 %v551, %v553
        %v555 = vrot.slane %v545, %v554
        %v557 = vunpack.c.l.s4 1966171168
        %v558 = vunpack.c.0.s8 %v557
        %v559 = vlaneseq
        %v560 = vshrl.u32 %v559, 7
        %v561 = vsub.s32 %v558, %v560
        %v562 = vrot.slane %v546, %v561
        %v564 = vunpack.c.l.s4 1966171168
        %v565 = vunpack.c.0.s8 %v564
        %v566 = vlaneseq
        %v567 = vshrl.u32 %v566, 7
        %v568 = vsub.s32 %v565, %v567
        %v569 = vrot.slane %v547, %v568
        %v571 = vunpack.c.l.s4 1966171168
        %v572 = vunpack.c.0.s8 %v571
        %v573 = vlaneseq
        %v574 = vshrl.u32 %v573, 7
        %v575 = vsub.s32 %v572, %v574
        %v576 = vrot.slane %v548, %v575
        %v577 = vcombine.low %v555, %v562
        %v578 = vcombine.low %v569, %v576
        %v580 = vunpack.c.l.s4 1966171168
        %v581 = vunpack.c.0.s8 %v580
        %v582 = vlaneseq
        %v583 = vshrl.u32 %v582, 7
        %v584 = vsub.s32 %v581, %v583
        %v585 = vrot.slane %v577, %v584
        %v587 = vunpack.c.l.s4 1966171168
        %v588 = vunpack.c.0.s8 %v587
        %v589 = vlaneseq
        %v590 = vshrl.u32 %v589, 7
        %v591 = vsub.s32 %v588, %v590
        %v592 = vrot.slane %v578, %v591
        %v593 = vcombine.low %v585, %v592
        %v594 = vcombine.low %v307, %v311
        %v595 = vcombine.low %v315, %v319
        %v596 = vcombine.low %v323, %v327
        %v597 = vcombine.low %v331, %v335
        %v599 = vunpack.c.l.s4 1966171168
        %v600 = vunpack.c.0.s8 %v599
        %v601 = vlaneseq
        %v602 = vshrl.u32 %v601, 7
        %v603 = vsub.s32 %v600, %v602
        %v604 = vrot.slane %v594, %v603
        %v606 = vunpack.c.l.s4 1966171168
        %v607 = vunpack.c.0.s8 %v606
        %v608 = vlaneseq
        %v609 = vshrl.u32 %v608, 7
        %v610 = vsub.s32 %v607, %v609
        %v611 = vrot.slane %v595, %v610
        %v613 = vunpack.c.l.s4 1966171168
        %v614 = vunpack.c.0.s8 %v613
        %v615 = vlaneseq
        %v616 = vshrl.u32 %v615, 7
        %v617 = vsub.s32 %v614, %v616
        %v618 = vrot.slane %v596, %v617
        %v620 = vunpack.c.l.s4 1966171168
        %v621 = vunpack.c.0.s8 %v620
        %v622 = vlaneseq
        %v623 = vshrl.u32 %v622, 7
        %v624 = vsub.s32 %v621, %v623
        %v625 = vrot.slane %v597, %v624
        %v626 = vcombine.low %v604, %v611
        %v627 = vcombine.low %v618, %v625
        %v629 = vunpack.c.l.s4 1966171168
        %v630 = vunpack.c.0.s8 %v629
        %v631 = vlaneseq
        %v632 = vshrl.u32 %v631, 7
        %v633 = vsub.s32 %v630, %v632
        %v634 = vrot.slane %v626, %v633
        %v636 = vunpack.c.l.s4 1966171168
        %v637 = vunpack.c.0.s8 %v636
        %v638 = vlaneseq
        %v639 = vshrl.u32 %v638, 7
        %v640 = vsub.s32 %v637, %v639
        %v641 = vrot.slane %v627, %v640
        %v642 = vcombine.low %v634, %v641
        %v643 = vcombine.low %v339, %v343
        %v644 = vcombine.low %v347, %v351
        %v645 = vcombine.low %v355, %v359
        %v646 = vcombine.low %v363, %v367
        %v648 = vunpack.c.l.s4 1966171168
        %v649 = vunpack.c.0.s8 %v648
        %v650 = vlaneseq
        %v651 = vshrl.u32 %v650, 7
        %v652 = vsub.s32 %v649, %v651
        %v653 = vrot.slane %v643, %v652
        %v655 = vunpack.c.l.s4 1966171168
        %v656 = vunpack.c.0.s8 %v655
        %v657 = vlaneseq
        %v658 = vshrl.u32 %v657, 7
        %v659 = vsub.s32 %v656, %v658
        %v660 = vrot.slane %v644, %v659
        %v662 = vunpack.c.l.s4 1966171168
        %v663 = vunpack.c.0.s8 %v662
        %v664 = vlaneseq
        %v665 = vshrl.u32 %v664, 7
        %v666 = vsub.s32 %v663, %v665
        %v667 = vrot.slane %v645, %v666
        %v669 = vunpack.c.l.s4 1966171168
        %v670 = vunpack.c.0.s8 %v669
        %v671 = vlaneseq
        %v672 = vshrl.u32 %v671, 7
        %v673 = vsub.s32 %v670, %v672
        %v674 = vrot.slane %v646, %v673
        %v675 = vcombine.low %v653, %v660
        %v676 = vcombine.low %v667, %v674
        %v678 = vunpack.c.l.s4 1966171168
        %v679 = vunpack.c.0.s8 %v678
        %v680 = vlaneseq
        %v681 = vshrl.u32 %v680, 7
        %v682 = vsub.s32 %v679, %v681
        %v683 = vrot.slane %v675, %v682
        %v685 = vunpack.c.l.s4 1966171168
        %v686 = vunpack.c.0.s8 %v685
        %v687 = vlaneseq
        %v688 = vshrl.u32 %v687, 7
        %v689 = vsub.s32 %v686, %v688
        %v690 = vrot.slane %v676, %v689
        %v691 = vcombine.low %v683, %v690
        %v692 = vcombine.low %v371, %v375
        %v693 = vcombine.low %v379, %v383
        %v694 = vcombine.low %v387, %v391
        %v695 = vcombine.low %v395, %v399
        %v697 = vunpack.c.l.s4 1966171168
        %v698 = vunpack.c.0.s8 %v697
        %v699 = vlaneseq
        %v700 = vshrl.u32 %v699, 7
        %v701 = vsub.s32 %v698, %v700
        %v702 = vrot.slane %v692, %v701
        %v704 = vunpack.c.l.s4 1966171168
        %v705 = vunpack.c.0.s8 %v704
        %v706 = vlaneseq
        %v707 = vshrl.u32 %v706, 7
        %v708 = vsub.s32 %v705, %v707
        %v709 = vrot.slane %v693, %v708
        %v711 = vunpack.c.l.s4 1966171168
        %v712 = vunpack.c.0.s8 %v711
        %v713 = vlaneseq
        %v714 = vshrl.u32 %v713, 7
        %v715 = vsub.s32 %v712, %v714
        %v716 = vrot.slane %v694, %v715
        %v718 = vunpack.c.l.s4 1966171168
        %v719 = vunpack.c.0.s8 %v718
        %v720 = vlaneseq
        %v721 = vshrl.u32 %v720, 7
        %v722 = vsub.s32 %v719, %v721
        %v723 = vrot.slane %v695, %v722
        %v724 = vcombine.low %v702, %v709
        %v725 = vcombine.low %v716, %v723
        %v727 = vunpack.c.l.s4 1966171168
        %v728 = vunpack.c.0.s8 %v727
        %v729 = vlaneseq
        %v730 = vshrl.u32 %v729, 7
        %v731 = vsub.s32 %v728, %v730
        %v732 = vrot.slane %v724, %v731
        %v734 = vunpack.c.l.s4 1966171168
        %v735 = vunpack.c.0.s8 %v734
        %v736 = vlaneseq
        %v737 = vshrl.u32 %v736, 7
        %v738 = vsub.s32 %v735, %v737
        %v739 = vrot.slane %v725, %v738
        %v740 = vcombine.low %v732, %v739
        %v741 = vcombine.low %v403, %v407
        %v742 = vcombine.low %v411, %v415
        %v743 = vcombine.low %v419, %v423
        %v744 = vcombine.low %v427, %v431
        %v746 = vunpack.c.l.s4 1966171168
        %v747 = vunpack.c.0.s8 %v746
        %v748 = vlaneseq
        %v749 = vshrl.u32 %v748, 7
        %v750 = vsub.s32 %v747, %v749
        %v751 = vrot.slane %v741, %v750
        %v753 = vunpack.c.l.s4 1966171168
        %v754 = vunpack.c.0.s8 %v753
        %v755 = vlaneseq
        %v756 = vshrl.u32 %v755, 7
        %v757 = vsub.s32 %v754, %v756
        %v758 = vrot.slane %v742, %v757
        %v760 = vunpack.c.l.s4 1966171168
        %v761 = vunpack.c.0.s8 %v760
        %v762 = vlaneseq
        %v763 = vshrl.u32 %v762, 7
        %v764 = vsub.s32 %v761, %v763
        %v765 = vrot.slane %v743, %v764
        %v767 = vunpack.c.l.s4 1966171168
        %v768 = vunpack.c.0.s8 %v767
        %v769 = vlaneseq
        %v770 = vshrl.u32 %v769, 7
        %v771 = vsub.s32 %v768, %v770
        %v772 = vrot.slane %v744, %v771
        %v773 = vcombine.low %v751, %v758
        %v774 = vcombine.low %v765, %v772
        %v776 = vunpack.c.l.s4 1966171168
        %v777 = vunpack.c.0.s8 %v776
        %v778 = vlaneseq
        %v779 = vshrl.u32 %v778, 7
        %v780 = vsub.s32 %v777, %v779
        %v781 = vrot.slane %v773, %v780
        %v783 = vunpack.c.l.s4 1966171168
        %v784 = vunpack.c.0.s8 %v783
        %v785 = vlaneseq
        %v786 = vshrl.u32 %v785, 7
        %v787 = vsub.s32 %v784, %v786
        %v788 = vrot.slane %v774, %v787
        %v789 = vcombine.low %v781, %v788
        %v790 = vcombine.low %v435, %v439
        %v791 = vcombine.low %v443, %v447
        %v792 = vcombine.low %v451, %v455
        %v793 = vcombine.low %v459, %v463
        %v795 = vunpack.c.l.s4 1966171168
        %v796 = vunpack.c.0.s8 %v795
        %v797 = vlaneseq
        %v798 = vshrl.u32 %v797, 7
        %v799 = vsub.s32 %v796, %v798
        %v800 = vrot.slane %v790, %v799
        %v802 = vunpack.c.l.s4 1966171168
        %v803 = vunpack.c.0.s8 %v802
        %v804 = vlaneseq
        %v805 = vshrl.u32 %v804, 7
        %v806 = vsub.s32 %v803, %v805
        %v807 = vrot.slane %v791, %v806
        %v809 = vunpack.c.l.s4 1966171168
        %v810 = vunpack.c.0.s8 %v809
        %v811 = vlaneseq
        %v812 = vshrl.u32 %v811, 7
        %v813 = vsub.s32 %v810, %v812
        %v814 = vrot.slane %v792, %v813
        %v816 = vunpack.c.l.s4 1966171168
        %v817 = vunpack.c.0.s8 %v816
        %v818 = vlaneseq
        %v819 = vshrl.u32 %v818, 7
        %v820 = vsub.s32 %v817, %v819
        %v821 = vrot.slane %v793, %v820
        %v822 = vcombine.low %v800, %v807
        %v823 = vcombine.low %v814, %v821
        %v825 = vunpack.c.l.s4 1966171168
        %v826 = vunpack.c.0.s8 %v825
        %v827 = vlaneseq
        %v828 = vshrl.u32 %v827, 7
        %v829 = vsub.s32 %v826, %v828
        %v830 = vrot.slane %v822, %v829
        %v832 = vunpack.c.l.s4 1966171168
        %v833 = vunpack.c.0.s8 %v832
        %v834 = vlaneseq
        %v835 = vshrl.u32 %v834, 7
        %v836 = vsub.s32 %v833, %v835
        %v837 = vrot.slane %v823, %v836
        %v838 = vcombine.low %v830, %v837
        %v839 = vcombine.low %v467, %v471
        %v840 = vcombine.low %v475, %v479
        %v841 = vcombine.low %v483, %v487
        %v842 = vcombine.low %v491, %v495
        %v844 = vunpack.c.l.s4 1966171168
        %v845 = vunpack.c.0.s8 %v844
        %v846 = vlaneseq
        %v847 = vshrl.u32 %v846, 7
        %v848 = vsub.s32 %v845, %v847
        %v849 = vrot.slane %v839, %v848
        %v851 = vunpack.c.l.s4 1966171168
        %v852 = vunpack.c.0.s8 %v851
        %v853 = vlaneseq
        %v854 = vshrl.u32 %v853, 7
        %v855 = vsub.s32 %v852, %v854
        %v856 = vrot.slane %v840, %v855
        %v858 = vunpack.c.l.s4 1966171168
        %v859 = vunpack.c.0.s8 %v858
        %v860 = vlaneseq
        %v861 = vshrl.u32 %v860, 7
        %v862 = vsub.s32 %v859, %v861
        %v863 = vrot.slane %v841, %v862
        %v865 = vunpack.c.l.s4 1966171168
        %v866 = vunpack.c.0.s8 %v865
        %v867 = vlaneseq
        %v868 = vshrl.u32 %v867, 7
        %v869 = vsub.s32 %v866, %v868
        %v870 = vrot.slane %v842, %v869
        %v871 = vcombine.low %v849, %v856
        %v872 = vcombine.low %v863, %v870
        %v874 = vunpack.c.l.s4 1966171168
        %v875 = vunpack.c.0.s8 %v874
        %v876 = vlaneseq
        %v877 = vshrl.u32 %v876, 7
        %v878 = vsub.s32 %v875, %v877
        %v879 = vrot.slane %v871, %v878
        %v881 = vunpack.c.l.s4 1966171168
        %v882 = vunpack.c.0.s8 %v881
        %v883 = vlaneseq
        %v884 = vshrl.u32 %v883, 7
        %v885 = vsub.s32 %v882, %v884
        %v886 = vrot.slane %v872, %v885
        %v887 = vcombine.low %v879, %v886
        %888 = vset.pattern.permute.xlu0 0
        %889 = vperm.xlu0 %888, %v544
        %v890 = vpop.permute.xlu0 %889
        %891 = vset.pattern.permute.xlu0 0
        %892 = vperm.xlu0 %891, %v593
        %v893 = vpop.permute.xlu0 %892
        %894 = vset.pattern.permute.xlu0 0
        %895 = vperm.xlu0 %894, %v642
        %v896 = vpop.permute.xlu0 %895
        %897 = vset.pattern.permute.xlu0 0
        %898 = vperm.xlu0 %897, %v691
        %v899 = vpop.permute.xlu0 %898
        %900 = vset.pattern.permute.xlu0 0
        %901 = vperm.xlu0 %900, %v740
        %v902 = vpop.permute.xlu0 %901
        %903 = vset.pattern.permute.xlu0 0
        %904 = vperm.xlu0 %903, %v789
        %v905 = vpop.permute.xlu0 %904
        %906 = vset.pattern.permute.xlu0 0
        %907 = vperm.xlu0 %906, %v838
        %v908 = vpop.permute.xlu0 %907
        %909 = vset.pattern.permute.xlu0 0
        %910 = vperm.xlu0 %909, %v887
        %v911 = vpop.permute.xlu0 %910
        %v912 = vlaneseq
        %v913 = vand.u32 %v912, 127
        %v914 = vlaneseq
        %v915 = vshrl.u32 %v914, 7
        %v916 = vsub.s32 %v913, %v915
        %v917 = vrot.slane %v890, %v916
        %v918 = vadd.s32 %v913, 4294967288
        %v919 = vlaneseq
        %v920 = vshrl.u32 %v919, 7
        %v921 = vsub.s32 %v918, %v920
        %v922 = vrot.slane %v893, %v921
        %vm923 = vcmask 130112
        %v924 = vsel %vm923, %v922, %v917
        %v925 = vadd.s32 %v913, 4294967280
        %v926 = vlaneseq
        %v927 = vshrl.u32 %v926, 7
        %v928 = vsub.s32 %v925, %v927
        %v929 = vrot.slane %v896, %v928
        %vm930 = vcmask 195712
        %v931 = vsel %vm930, %v929, %v924
        %v932 = vadd.s32 %v913, 4294967272
        %v933 = vlaneseq
        %v934 = vshrl.u32 %v933, 7
        %v935 = vsub.s32 %v932, %v934
        %v936 = vrot.slane %v899, %v935
        %vm937 = vcmask 261312
        %v938 = vsel %vm937, %v936, %v931
        %v939 = vadd.s32 %v913, 4294967264
        %v940 = vlaneseq
        %v941 = vshrl.u32 %v940, 7
        %v942 = vsub.s32 %v939, %v941
        %v943 = vrot.slane %v902, %v942
        %vm944 = vcmask 326912
        %v945 = vsel %vm944, %v943, %v938
        %v946 = vadd.s32 %v913, 4294967256
        %v947 = vlaneseq
        %v948 = vshrl.u32 %v947, 7
        %v949 = vsub.s32 %v946, %v948
        %v950 = vrot.slane %v905, %v949
        %vm951 = vcmask 392512
        %v952 = vsel %vm951, %v950, %v945
        %v953 = vadd.s32 %v913, 4294967248
        %v954 = vlaneseq
        %v955 = vshrl.u32 %v954, 7
        %v956 = vsub.s32 %v953, %v955
        %v957 = vrot.slane %v908, %v956
        %vm958 = vcmask 458112
        %v959 = vsel %vm958, %v957, %v952
        %v960 = vadd.s32 %v913, 4294967240
        %v961 = vlaneseq
        %v962 = vshrl.u32 %v961, 7
        %v963 = vsub.s32 %v960, %v962
        %v964 = vrot.slane %v911, %v963
        %vm965 = vcmask 523712
        %v966 = vsel %vm965, %v964, %v959
        %v968 = vunpack.c.l.s4 1966171168
        %v969 = vunpack.c.0.s8 %v968
        %v970 = vlaneseq
        %v971 = vshrl.u32 %v970, 7
        %v972 = vsub.s32 %v969, %v971
        %v973 = vrot.slane %v966, %v972
        %v975 = vunpack.c.l.s4 1966171168
        %v976 = vunpack.c.0.s8 %v975
        %v977 = vlaneseq
        %v978 = vshrl.u32 %v977, 7
        %v979 = vsub.s32 %v976, %v978
        %v980 = vrot.slane %v973, %v979
        %v982 = vadd.f32 %v206, %v980
        %vm983 = vcmask 516096
        %984 = vst.msk [vmem:[#allocation2] sm:$0x1] %vm983, %v982
        %v985 = vld [vmem:[#allocation3] sm:$0x1]
        %v986 = vsel %vm207, %v191, -inf
        %987 = vmax.xlane.f32.xlu0 %v986
        %v988 = vpop.xlane.xlu0 %987
        %v989 = vsel %vm207, %v192, -inf
        %990 = vmax.xlane.f32.xlu0 %v989
        %v991 = vpop.xlane.xlu0 %990
        %v992 = vsel %vm207, %v193, -inf
        %993 = vmax.xlane.f32.xlu0 %v992
        %v994 = vpop.xlane.xlu0 %993
        %v995 = vsel %vm207, %v194, -inf
        %996 = vmax.xlane.f32.xlu0 %v995
        %v997 = vpop.xlane.xlu0 %996
        %v998 = vsel %vm207, %v195, -inf
        %999 = vmax.xlane.f32.xlu0 %v998
        %v1000 = vpop.xlane.xlu0 %999
        %v1001 = vsel %vm207, %v196, -inf
        %1002 = vmax.xlane.f32.xlu0 %v1001
        %v1003 = vpop.xlane.xlu0 %1002
        %v1004 = vsel %vm207, %v197, -inf
        %1005 = vmax.xlane.f32.xlu0 %v1004
        %v1006 = vpop.xlane.xlu0 %1005
        %v1007 = vsel %vm207, %v198, -inf
        %1008 = vmax.xlane.f32.xlu0 %v1007
        %v1009 = vpop.xlane.xlu0 %1008
        %v1018 = vlaneseq
        %v1019 = vshrl.u32 %v1018, 7
        %v1020 = vsub.s32 0, %v1019
        %v1021 = vrot.slane %v988, %v1020
        %v1022 = vlaneseq
        %v1023 = vshrl.u32 %v1022, 7
        %v1024 = vsub.s32 1, %v1023
        %v1025 = vrot.slane %v988, %v1024
        %v1026 = vlaneseq
        %v1027 = vshrl.u32 %v1026, 7
        %v1028 = vsub.s32 2, %v1027
        %v1029 = vrot.slane %v988, %v1028
        %v1030 = vlaneseq
        %v1031 = vshrl.u32 %v1030, 7
        %v1032 = vsub.s32 3, %v1031
        %v1033 = vrot.slane %v988, %v1032
        %v1034 = vlaneseq
        %v1035 = vshrl.u32 %v1034, 7
        %v1036 = vsub.s32 4, %v1035
        %v1037 = vrot.slane %v988, %v1036
        %v1038 = vlaneseq
        %v1039 = vshrl.u32 %v1038, 7
        %v1040 = vsub.s32 5, %v1039
        %v1041 = vrot.slane %v988, %v1040
        %v1042 = vlaneseq
        %v1043 = vshrl.u32 %v1042, 7
        %v1044 = vsub.s32 6, %v1043
        %v1045 = vrot.slane %v988, %v1044
        %v1046 = vlaneseq
        %v1047 = vshrl.u32 %v1046, 7
        %v1048 = vsub.s32 7, %v1047
        %v1049 = vrot.slane %v988, %v1048
        %v1050 = vlaneseq
        %v1051 = vshrl.u32 %v1050, 7
        %v1052 = vsub.s32 0, %v1051
        %v1053 = vrot.slane %v991, %v1052
        %v1054 = vlaneseq
        %v1055 = vshrl.u32 %v1054, 7
        %v1056 = vsub.s32 1, %v1055
        %v1057 = vrot.slane %v991, %v1056
        %v1058 = vlaneseq
        %v1059 = vshrl.u32 %v1058, 7
        %v1060 = vsub.s32 2, %v1059
        %v1061 = vrot.slane %v991, %v1060
        %v1062 = vlaneseq
        %v1063 = vshrl.u32 %v1062, 7
        %v1064 = vsub.s32 3, %v1063
        %v1065 = vrot.slane %v991, %v1064
        %v1066 = vlaneseq
        %v1067 = vshrl.u32 %v1066, 7
        %v1068 = vsub.s32 4, %v1067
        %v1069 = vrot.slane %v991, %v1068
        %v1070 = vlaneseq
        %v1071 = vshrl.u32 %v1070, 7
        %v1072 = vsub.s32 5, %v1071
        %v1073 = vrot.slane %v991, %v1072
        %v1074 = vlaneseq
        %v1075 = vshrl.u32 %v1074, 7
        %v1076 = vsub.s32 6, %v1075
        %v1077 = vrot.slane %v991, %v1076
        %v1078 = vlaneseq
        %v1079 = vshrl.u32 %v1078, 7
        %v1080 = vsub.s32 7, %v1079
        %v1081 = vrot.slane %v991, %v1080
        %v1082 = vlaneseq
        %v1083 = vshrl.u32 %v1082, 7
        %v1084 = vsub.s32 0, %v1083
        %v1085 = vrot.slane %v994, %v1084
        %v1086 = vlaneseq
        %v1087 = vshrl.u32 %v1086, 7
        %v1088 = vsub.s32 1, %v1087
        %v1089 = vrot.slane %v994, %v1088
        %v1090 = vlaneseq
        %v1091 = vshrl.u32 %v1090, 7
        %v1092 = vsub.s32 2, %v1091
        %v1093 = vrot.slane %v994, %v1092
        %v1094 = vlaneseq
        %v1095 = vshrl.u32 %v1094, 7
        %v1096 = vsub.s32 3, %v1095
        %v1097 = vrot.slane %v994, %v1096
        %v1098 = vlaneseq
        %v1099 = vshrl.u32 %v1098, 7
        %v1100 = vsub.s32 4, %v1099
        %v1101 = vrot.slane %v994, %v1100
        %v1102 = vlaneseq
        %v1103 = vshrl.u32 %v1102, 7
        %v1104 = vsub.s32 5, %v1103
        %v1105 = vrot.slane %v994, %v1104
        %v1106 = vlaneseq
        %v1107 = vshrl.u32 %v1106, 7
        %v1108 = vsub.s32 6, %v1107
        %v1109 = vrot.slane %v994, %v1108
        %v1110 = vlaneseq
        %v1111 = vshrl.u32 %v1110, 7
        %v1112 = vsub.s32 7, %v1111
        %v1113 = vrot.slane %v994, %v1112
        %v1114 = vlaneseq
        %v1115 = vshrl.u32 %v1114, 7
        %v1116 = vsub.s32 0, %v1115
        %v1117 = vrot.slane %v997, %v1116
        %v1118 = vlaneseq
        %v1119 = vshrl.u32 %v1118, 7
        %v1120 = vsub.s32 1, %v1119
        %v1121 = vrot.slane %v997, %v1120
        %v1122 = vlaneseq
        %v1123 = vshrl.u32 %v1122, 7
        %v1124 = vsub.s32 2, %v1123
        %v1125 = vrot.slane %v997, %v1124
        %v1126 = vlaneseq
        %v1127 = vshrl.u32 %v1126, 7
        %v1128 = vsub.s32 3, %v1127
        %v1129 = vrot.slane %v997, %v1128
        %v1130 = vlaneseq
        %v1131 = vshrl.u32 %v1130, 7
        %v1132 = vsub.s32 4, %v1131
        %v1133 = vrot.slane %v997, %v1132
        %v1134 = vlaneseq
        %v1135 = vshrl.u32 %v1134, 7
        %v1136 = vsub.s32 5, %v1135
        %v1137 = vrot.slane %v997, %v1136
        %v1138 = vlaneseq
        %v1139 = vshrl.u32 %v1138, 7
        %v1140 = vsub.s32 6, %v1139
        %v1141 = vrot.slane %v997, %v1140
        %v1142 = vlaneseq
        %v1143 = vshrl.u32 %v1142, 7
        %v1144 = vsub.s32 7, %v1143
        %v1145 = vrot.slane %v997, %v1144
        %v1146 = vlaneseq
        %v1147 = vshrl.u32 %v1146, 7
        %v1148 = vsub.s32 0, %v1147
        %v1149 = vrot.slane %v1000, %v1148
        %v1150 = vlaneseq
        %v1151 = vshrl.u32 %v1150, 7
        %v1152 = vsub.s32 1, %v1151
        %v1153 = vrot.slane %v1000, %v1152
        %v1154 = vlaneseq
        %v1155 = vshrl.u32 %v1154, 7
        %v1156 = vsub.s32 2, %v1155
        %v1157 = vrot.slane %v1000, %v1156
        %v1158 = vlaneseq
        %v1159 = vshrl.u32 %v1158, 7
        %v1160 = vsub.s32 3, %v1159
        %v1161 = vrot.slane %v1000, %v1160
        %v1162 = vlaneseq
        %v1163 = vshrl.u32 %v1162, 7
        %v1164 = vsub.s32 4, %v1163
        %v1165 = vrot.slane %v1000, %v1164
        %v1166 = vlaneseq
        %v1167 = vshrl.u32 %v1166, 7
        %v1168 = vsub.s32 5, %v1167
        %v1169 = vrot.slane %v1000, %v1168
        %v1170 = vlaneseq
        %v1171 = vshrl.u32 %v1170, 7
        %v1172 = vsub.s32 6, %v1171
        %v1173 = vrot.slane %v1000, %v1172
        %v1174 = vlaneseq
        %v1175 = vshrl.u32 %v1174, 7
        %v1176 = vsub.s32 7, %v1175
        %v1177 = vrot.slane %v1000, %v1176
        %v1178 = vlaneseq
        %v1179 = vshrl.u32 %v1178, 7
        %v1180 = vsub.s32 0, %v1179
        %v1181 = vrot.slane %v1003, %v1180
        %v1182 = vlaneseq
        %v1183 = vshrl.u32 %v1182, 7
        %v1184 = vsub.s32 1, %v1183
        %v1185 = vrot.slane %v1003, %v1184
        %v1186 = vlaneseq
        %v1187 = vshrl.u32 %v1186, 7
        %v1188 = vsub.s32 2, %v1187
        %v1189 = vrot.slane %v1003, %v1188
        %v1190 = vlaneseq
        %v1191 = vshrl.u32 %v1190, 7
        %v1192 = vsub.s32 3, %v1191
        %v1193 = vrot.slane %v1003, %v1192
        %v1194 = vlaneseq
        %v1195 = vshrl.u32 %v1194, 7
        %v1196 = vsub.s32 4, %v1195
        %v1197 = vrot.slane %v1003, %v1196
        %v1198 = vlaneseq
        %v1199 = vshrl.u32 %v1198, 7
        %v1200 = vsub.s32 5, %v1199
        %v1201 = vrot.slane %v1003, %v1200
        %v1202 = vlaneseq
        %v1203 = vshrl.u32 %v1202, 7
        %v1204 = vsub.s32 6, %v1203
        %v1205 = vrot.slane %v1003, %v1204
        %v1206 = vlaneseq
        %v1207 = vshrl.u32 %v1206, 7
        %v1208 = vsub.s32 7, %v1207
        %v1209 = vrot.slane %v1003, %v1208
        %v1210 = vlaneseq
        %v1211 = vshrl.u32 %v1210, 7
        %v1212 = vsub.s32 0, %v1211
        %v1213 = vrot.slane %v1006, %v1212
        %v1214 = vlaneseq
        %v1215 = vshrl.u32 %v1214, 7
        %v1216 = vsub.s32 1, %v1215
        %v1217 = vrot.slane %v1006, %v1216
        %v1218 = vlaneseq
        %v1219 = vshrl.u32 %v1218, 7
        %v1220 = vsub.s32 2, %v1219
        %v1221 = vrot.slane %v1006, %v1220
        %v1222 = vlaneseq
        %v1223 = vshrl.u32 %v1222, 7
        %v1224 = vsub.s32 3, %v1223
        %v1225 = vrot.slane %v1006, %v1224
        %v1226 = vlaneseq
        %v1227 = vshrl.u32 %v1226, 7
        %v1228 = vsub.s32 4, %v1227
        %v1229 = vrot.slane %v1006, %v1228
        %v1230 = vlaneseq
        %v1231 = vshrl.u32 %v1230, 7
        %v1232 = vsub.s32 5, %v1231
        %v1233 = vrot.slane %v1006, %v1232
        %v1234 = vlaneseq
        %v1235 = vshrl.u32 %v1234, 7
        %v1236 = vsub.s32 6, %v1235
        %v1237 = vrot.slane %v1006, %v1236
        %v1238 = vlaneseq
        %v1239 = vshrl.u32 %v1238, 7
        %v1240 = vsub.s32 7, %v1239
        %v1241 = vrot.slane %v1006, %v1240
        %v1242 = vlaneseq
        %v1243 = vshrl.u32 %v1242, 7
        %v1244 = vsub.s32 0, %v1243
        %v1245 = vrot.slane %v1009, %v1244
        %v1246 = vlaneseq
        %v1247 = vshrl.u32 %v1246, 7
        %v1248 = vsub.s32 1, %v1247
        %v1249 = vrot.slane %v1009, %v1248
        %v1250 = vlaneseq
        %v1251 = vshrl.u32 %v1250, 7
        %v1252 = vsub.s32 2, %v1251
        %v1253 = vrot.slane %v1009, %v1252
        %v1254 = vlaneseq
        %v1255 = vshrl.u32 %v1254, 7
        %v1256 = vsub.s32 3, %v1255
        %v1257 = vrot.slane %v1009, %v1256
        %v1258 = vlaneseq
        %v1259 = vshrl.u32 %v1258, 7
        %v1260 = vsub.s32 4, %v1259
        %v1261 = vrot.slane %v1009, %v1260
        %v1262 = vlaneseq
        %v1263 = vshrl.u32 %v1262, 7
        %v1264 = vsub.s32 5, %v1263
        %v1265 = vrot.slane %v1009, %v1264
        %v1266 = vlaneseq
        %v1267 = vshrl.u32 %v1266, 7
        %v1268 = vsub.s32 6, %v1267
        %v1269 = vrot.slane %v1009, %v1268
        %v1270 = vlaneseq
        %v1271 = vshrl.u32 %v1270, 7
        %v1272 = vsub.s32 7, %v1271
        %v1273 = vrot.slane %v1009, %v1272
        %v1274 = vcombine.low %v1021, %v1025
        %v1275 = vcombine.low %v1029, %v1033
        %v1276 = vcombine.low %v1037, %v1041
        %v1277 = vcombine.low %v1045, %v1049
        %v1279 = vunpack.c.l.s4 1966171168
        %v1280 = vunpack.c.0.s8 %v1279
        %v1281 = vlaneseq
        %v1282 = vshrl.u32 %v1281, 7
        %v1283 = vsub.s32 %v1280, %v1282
        %v1284 = vrot.slane %v1274, %v1283
        %v1286 = vunpack.c.l.s4 1966171168
        %v1287 = vunpack.c.0.s8 %v1286
        %v1288 = vlaneseq
        %v1289 = vshrl.u32 %v1288, 7
        %v1290 = vsub.s32 %v1287, %v1289
        %v1291 = vrot.slane %v1275, %v1290
        %v1293 = vunpack.c.l.s4 1966171168
        %v1294 = vunpack.c.0.s8 %v1293
        %v1295 = vlaneseq
        %v1296 = vshrl.u32 %v1295, 7
        %v1297 = vsub.s32 %v1294, %v1296
        %v1298 = vrot.slane %v1276, %v1297
        %v1300 = vunpack.c.l.s4 1966171168
        %v1301 = vunpack.c.0.s8 %v1300
        %v1302 = vlaneseq
        %v1303 = vshrl.u32 %v1302, 7
        %v1304 = vsub.s32 %v1301, %v1303
        %v1305 = vrot.slane %v1277, %v1304
        %v1306 = vcombine.low %v1284, %v1291
        %v1307 = vcombine.low %v1298, %v1305
        %v1309 = vunpack.c.l.s4 1966171168
        %v1310 = vunpack.c.0.s8 %v1309
        %v1311 = vlaneseq
        %v1312 = vshrl.u32 %v1311, 7
        %v1313 = vsub.s32 %v1310, %v1312
        %v1314 = vrot.slane %v1306, %v1313
        %v1316 = vunpack.c.l.s4 1966171168
        %v1317 = vunpack.c.0.s8 %v1316
        %v1318 = vlaneseq
        %v1319 = vshrl.u32 %v1318, 7
        %v1320 = vsub.s32 %v1317, %v1319
        %v1321 = vrot.slane %v1307, %v1320
        %v1322 = vcombine.low %v1314, %v1321
        %v1323 = vcombine.low %v1053, %v1057
        %v1324 = vcombine.low %v1061, %v1065
        %v1325 = vcombine.low %v1069, %v1073
        %v1326 = vcombine.low %v1077, %v1081
        %v1328 = vunpack.c.l.s4 1966171168
        %v1329 = vunpack.c.0.s8 %v1328
        %v1330 = vlaneseq
        %v1331 = vshrl.u32 %v1330, 7
        %v1332 = vsub.s32 %v1329, %v1331
        %v1333 = vrot.slane %v1323, %v1332
        %v1335 = vunpack.c.l.s4 1966171168
        %v1336 = vunpack.c.0.s8 %v1335
        %v1337 = vlaneseq
        %v1338 = vshrl.u32 %v1337, 7
        %v1339 = vsub.s32 %v1336, %v1338
        %v1340 = vrot.slane %v1324, %v1339
        %v1342 = vunpack.c.l.s4 1966171168
        %v1343 = vunpack.c.0.s8 %v1342
        %v1344 = vlaneseq
        %v1345 = vshrl.u32 %v1344, 7
        %v1346 = vsub.s32 %v1343, %v1345
        %v1347 = vrot.slane %v1325, %v1346
        %v1349 = vunpack.c.l.s4 1966171168
        %v1350 = vunpack.c.0.s8 %v1349
        %v1351 = vlaneseq
        %v1352 = vshrl.u32 %v1351, 7
        %v1353 = vsub.s32 %v1350, %v1352
        %v1354 = vrot.slane %v1326, %v1353
        %v1355 = vcombine.low %v1333, %v1340
        %v1356 = vcombine.low %v1347, %v1354
        %v1358 = vunpack.c.l.s4 1966171168
        %v1359 = vunpack.c.0.s8 %v1358
        %v1360 = vlaneseq
        %v1361 = vshrl.u32 %v1360, 7
        %v1362 = vsub.s32 %v1359, %v1361
        %v1363 = vrot.slane %v1355, %v1362
        %v1365 = vunpack.c.l.s4 1966171168
        %v1366 = vunpack.c.0.s8 %v1365
        %v1367 = vlaneseq
        %v1368 = vshrl.u32 %v1367, 7
        %v1369 = vsub.s32 %v1366, %v1368
        %v1370 = vrot.slane %v1356, %v1369
        %v1371 = vcombine.low %v1363, %v1370
        %v1372 = vcombine.low %v1085, %v1089
        %v1373 = vcombine.low %v1093, %v1097
        %v1374 = vcombine.low %v1101, %v1105
        %v1375 = vcombine.low %v1109, %v1113
        %v1377 = vunpack.c.l.s4 1966171168
        %v1378 = vunpack.c.0.s8 %v1377
        %v1379 = vlaneseq
        %v1380 = vshrl.u32 %v1379, 7
        %v1381 = vsub.s32 %v1378, %v1380
        %v1382 = vrot.slane %v1372, %v1381
        %v1384 = vunpack.c.l.s4 1966171168
        %v1385 = vunpack.c.0.s8 %v1384
        %v1386 = vlaneseq
        %v1387 = vshrl.u32 %v1386, 7
        %v1388 = vsub.s32 %v1385, %v1387
        %v1389 = vrot.slane %v1373, %v1388
        %v1391 = vunpack.c.l.s4 1966171168
        %v1392 = vunpack.c.0.s8 %v1391
        %v1393 = vlaneseq
        %v1394 = vshrl.u32 %v1393, 7
        %v1395 = vsub.s32 %v1392, %v1394
        %v1396 = vrot.slane %v1374, %v1395
        %v1398 = vunpack.c.l.s4 1966171168
        %v1399 = vunpack.c.0.s8 %v1398
        %v1400 = vlaneseq
        %v1401 = vshrl.u32 %v1400, 7
        %v1402 = vsub.s32 %v1399, %v1401
        %v1403 = vrot.slane %v1375, %v1402
        %v1404 = vcombine.low %v1382, %v1389
        %v1405 = vcombine.low %v1396, %v1403
        %v1407 = vunpack.c.l.s4 1966171168
        %v1408 = vunpack.c.0.s8 %v1407
        %v1409 = vlaneseq
        %v1410 = vshrl.u32 %v1409, 7
        %v1411 = vsub.s32 %v1408, %v1410
        %v1412 = vrot.slane %v1404, %v1411
        %v1414 = vunpack.c.l.s4 1966171168
        %v1415 = vunpack.c.0.s8 %v1414
        %v1416 = vlaneseq
        %v1417 = vshrl.u32 %v1416, 7
        %v1418 = vsub.s32 %v1415, %v1417
        %v1419 = vrot.slane %v1405, %v1418
        %v1420 = vcombine.low %v1412, %v1419
        %v1421 = vcombine.low %v1117, %v1121
        %v1422 = vcombine.low %v1125, %v1129
        %v1423 = vcombine.low %v1133, %v1137
        %v1424 = vcombine.low %v1141, %v1145
        %v1426 = vunpack.c.l.s4 1966171168
        %v1427 = vunpack.c.0.s8 %v1426
        %v1428 = vlaneseq
        %v1429 = vshrl.u32 %v1428, 7
        %v1430 = vsub.s32 %v1427, %v1429
        %v1431 = vrot.slane %v1421, %v1430
        %v1433 = vunpack.c.l.s4 1966171168
        %v1434 = vunpack.c.0.s8 %v1433
        %v1435 = vlaneseq
        %v1436 = vshrl.u32 %v1435, 7
        %v1437 = vsub.s32 %v1434, %v1436
        %v1438 = vrot.slane %v1422, %v1437
        %v1440 = vunpack.c.l.s4 1966171168
        %v1441 = vunpack.c.0.s8 %v1440
        %v1442 = vlaneseq
        %v1443 = vshrl.u32 %v1442, 7
        %v1444 = vsub.s32 %v1441, %v1443
        %v1445 = vrot.slane %v1423, %v1444
        %v1447 = vunpack.c.l.s4 1966171168
        %v1448 = vunpack.c.0.s8 %v1447
        %v1449 = vlaneseq
        %v1450 = vshrl.u32 %v1449, 7
        %v1451 = vsub.s32 %v1448, %v1450
        %v1452 = vrot.slane %v1424, %v1451
        %v1453 = vcombine.low %v1431, %v1438
        %v1454 = vcombine.low %v1445, %v1452
        %v1456 = vunpack.c.l.s4 1966171168
        %v1457 = vunpack.c.0.s8 %v1456
        %v1458 = vlaneseq
        %v1459 = vshrl.u32 %v1458, 7
        %v1460 = vsub.s32 %v1457, %v1459
        %v1461 = vrot.slane %v1453, %v1460
        %v1463 = vunpack.c.l.s4 1966171168
        %v1464 = vunpack.c.0.s8 %v1463
        %v1465 = vlaneseq
        %v1466 = vshrl.u32 %v1465, 7
        %v1467 = vsub.s32 %v1464, %v1466
        %v1468 = vrot.slane %v1454, %v1467
        %v1469 = vcombine.low %v1461, %v1468
        %v1470 = vcombine.low %v1149, %v1153
        %v1471 = vcombine.low %v1157, %v1161
        %v1472 = vcombine.low %v1165, %v1169
        %v1473 = vcombine.low %v1173, %v1177
        %v1475 = vunpack.c.l.s4 1966171168
        %v1476 = vunpack.c.0.s8 %v1475
        %v1477 = vlaneseq
        %v1478 = vshrl.u32 %v1477, 7
        %v1479 = vsub.s32 %v1476, %v1478
        %v1480 = vrot.slane %v1470, %v1479
        %v1482 = vunpack.c.l.s4 1966171168
        %v1483 = vunpack.c.0.s8 %v1482
        %v1484 = vlaneseq
        %v1485 = vshrl.u32 %v1484, 7
        %v1486 = vsub.s32 %v1483, %v1485
        %v1487 = vrot.slane %v1471, %v1486
        %v1489 = vunpack.c.l.s4 1966171168
        %v1490 = vunpack.c.0.s8 %v1489
        %v1491 = vlaneseq
        %v1492 = vshrl.u32 %v1491, 7
        %v1493 = vsub.s32 %v1490, %v1492
        %v1494 = vrot.slane %v1472, %v1493
        %v1496 = vunpack.c.l.s4 1966171168
        %v1497 = vunpack.c.0.s8 %v1496
        %v1498 = vlaneseq
        %v1499 = vshrl.u32 %v1498, 7
        %v1500 = vsub.s32 %v1497, %v1499
        %v1501 = vrot.slane %v1473, %v1500
        %v1502 = vcombine.low %v1480, %v1487
        %v1503 = vcombine.low %v1494, %v1501
        %v1505 = vunpack.c.l.s4 1966171168
        %v1506 = vunpack.c.0.s8 %v1505
        %v1507 = vlaneseq
        %v1508 = vshrl.u32 %v1507, 7
        %v1509 = vsub.s32 %v1506, %v1508
        %v1510 = vrot.slane %v1502, %v1509
        %v1512 = vunpack.c.l.s4 1966171168
        %v1513 = vunpack.c.0.s8 %v1512
        %v1514 = vlaneseq
        %v1515 = vshrl.u32 %v1514, 7
        %v1516 = vsub.s32 %v1513, %v1515
        %v1517 = vrot.slane %v1503, %v1516
        %v1518 = vcombine.low %v1510, %v1517
        %v1519 = vcombine.low %v1181, %v1185
        %v1520 = vcombine.low %v1189, %v1193
        %v1521 = vcombine.low %v1197, %v1201
        %v1522 = vcombine.low %v1205, %v1209
        %v1524 = vunpack.c.l.s4 1966171168
        %v1525 = vunpack.c.0.s8 %v1524
        %v1526 = vlaneseq
        %v1527 = vshrl.u32 %v1526, 7
        %v1528 = vsub.s32 %v1525, %v1527
        %v1529 = vrot.slane %v1519, %v1528
        %v1531 = vunpack.c.l.s4 1966171168
        %v1532 = vunpack.c.0.s8 %v1531
        %v1533 = vlaneseq
        %v1534 = vshrl.u32 %v1533, 7
        %v1535 = vsub.s32 %v1532, %v1534
        %v1536 = vrot.slane %v1520, %v1535
        %v1538 = vunpack.c.l.s4 1966171168
        %v1539 = vunpack.c.0.s8 %v1538
        %v1540 = vlaneseq
        %v1541 = vshrl.u32 %v1540, 7
        %v1542 = vsub.s32 %v1539, %v1541
        %v1543 = vrot.slane %v1521, %v1542
        %v1545 = vunpack.c.l.s4 1966171168
        %v1546 = vunpack.c.0.s8 %v1545
        %v1547 = vlaneseq
        %v1548 = vshrl.u32 %v1547, 7
        %v1549 = vsub.s32 %v1546, %v1548
        %v1550 = vrot.slane %v1522, %v1549
        %v1551 = vcombine.low %v1529, %v1536
        %v1552 = vcombine.low %v1543, %v1550
        %v1554 = vunpack.c.l.s4 1966171168
        %v1555 = vunpack.c.0.s8 %v1554
        %v1556 = vlaneseq
        %v1557 = vshrl.u32 %v1556, 7
        %v1558 = vsub.s32 %v1555, %v1557
        %v1559 = vrot.slane %v1551, %v1558
        %v1561 = vunpack.c.l.s4 1966171168
        %v1562 = vunpack.c.0.s8 %v1561
        %v1563 = vlaneseq
        %v1564 = vshrl.u32 %v1563, 7
        %v1565 = vsub.s32 %v1562, %v1564
        %v1566 = vrot.slane %v1552, %v1565
        %v1567 = vcombine.low %v1559, %v1566
        %v1568 = vcombine.low %v1213, %v1217
        %v1569 = vcombine.low %v1221, %v1225
        %v1570 = vcombine.low %v1229, %v1233
        %v1571 = vcombine.low %v1237, %v1241
        %v1573 = vunpack.c.l.s4 1966171168
        %v1574 = vunpack.c.0.s8 %v1573
        %v1575 = vlaneseq
        %v1576 = vshrl.u32 %v1575, 7
        %v1577 = vsub.s32 %v1574, %v1576
        %v1578 = vrot.slane %v1568, %v1577
        %v1580 = vunpack.c.l.s4 1966171168
        %v1581 = vunpack.c.0.s8 %v1580
        %v1582 = vlaneseq
        %v1583 = vshrl.u32 %v1582, 7
        %v1584 = vsub.s32 %v1581, %v1583
        %v1585 = vrot.slane %v1569, %v1584
        %v1587 = vunpack.c.l.s4 1966171168
        %v1588 = vunpack.c.0.s8 %v1587
        %v1589 = vlaneseq
        %v1590 = vshrl.u32 %v1589, 7
        %v1591 = vsub.s32 %v1588, %v1590
        %v1592 = vrot.slane %v1570, %v1591
        %v1594 = vunpack.c.l.s4 1966171168
        %v1595 = vunpack.c.0.s8 %v1594
        %v1596 = vlaneseq
        %v1597 = vshrl.u32 %v1596, 7
        %v1598 = vsub.s32 %v1595, %v1597
        %v1599 = vrot.slane %v1571, %v1598
        %v1600 = vcombine.low %v1578, %v1585
        %v1601 = vcombine.low %v1592, %v1599
        %v1603 = vunpack.c.l.s4 1966171168
        %v1604 = vunpack.c.0.s8 %v1603
        %v1605 = vlaneseq
        %v1606 = vshrl.u32 %v1605, 7
        %v1607 = vsub.s32 %v1604, %v1606
        %v1608 = vrot.slane %v1600, %v1607
        %v1610 = vunpack.c.l.s4 1966171168
        %v1611 = vunpack.c.0.s8 %v1610
        %v1612 = vlaneseq
        %v1613 = vshrl.u32 %v1612, 7
        %v1614 = vsub.s32 %v1611, %v1613
        %v1615 = vrot.slane %v1601, %v1614
        %v1616 = vcombine.low %v1608, %v1615
        %v1617 = vcombine.low %v1245, %v1249
        %v1618 = vcombine.low %v1253, %v1257
        %v1619 = vcombine.low %v1261, %v1265
        %v1620 = vcombine.low %v1269, %v1273
        %v1622 = vunpack.c.l.s4 1966171168
        %v1623 = vunpack.c.0.s8 %v1622
        %v1624 = vlaneseq
        %v1625 = vshrl.u32 %v1624, 7
        %v1626 = vsub.s32 %v1623, %v1625
        %v1627 = vrot.slane %v1617, %v1626
        %v1629 = vunpack.c.l.s4 1966171168
        %v1630 = vunpack.c.0.s8 %v1629
        %v1631 = vlaneseq
        %v1632 = vshrl.u32 %v1631, 7
        %v1633 = vsub.s32 %v1630, %v1632
        %v1634 = vrot.slane %v1618, %v1633
        %v1636 = vunpack.c.l.s4 1966171168
        %v1637 = vunpack.c.0.s8 %v1636
        %v1638 = vlaneseq
        %v1639 = vshrl.u32 %v1638, 7
        %v1640 = vsub.s32 %v1637, %v1639
        %v1641 = vrot.slane %v1619, %v1640
        %v1643 = vunpack.c.l.s4 1966171168
        %v1644 = vunpack.c.0.s8 %v1643
        %v1645 = vlaneseq
        %v1646 = vshrl.u32 %v1645, 7
        %v1647 = vsub.s32 %v1644, %v1646
        %v1648 = vrot.slane %v1620, %v1647
        %v1649 = vcombine.low %v1627, %v1634
        %v1650 = vcombine.low %v1641, %v1648
        %v1652 = vunpack.c.l.s4 1966171168
        %v1653 = vunpack.c.0.s8 %v1652
        %v1654 = vlaneseq
        %v1655 = vshrl.u32 %v1654, 7
        %v1656 = vsub.s32 %v1653, %v1655
        %v1657 = vrot.slane %v1649, %v1656
        %v1659 = vunpack.c.l.s4 1966171168
        %v1660 = vunpack.c.0.s8 %v1659
        %v1661 = vlaneseq
        %v1662 = vshrl.u32 %v1661, 7
        %v1663 = vsub.s32 %v1660, %v1662
        %v1664 = vrot.slane %v1650, %v1663
        %v1665 = vcombine.low %v1657, %v1664
        %1666 = vset.pattern.permute.xlu0 0
        %1667 = vperm.xlu0 %1666, %v1322
        %v1668 = vpop.permute.xlu0 %1667
        %1669 = vset.pattern.permute.xlu0 0
        %1670 = vperm.xlu0 %1669, %v1371
        %v1671 = vpop.permute.xlu0 %1670
        %1672 = vset.pattern.permute.xlu0 0
        %1673 = vperm.xlu0 %1672, %v1420
        %v1674 = vpop.permute.xlu0 %1673
        %1675 = vset.pattern.permute.xlu0 0
        %1676 = vperm.xlu0 %1675, %v1469
        %v1677 = vpop.permute.xlu0 %1676
        %1678 = vset.pattern.permute.xlu0 0
        %1679 = vperm.xlu0 %1678, %v1518
        %v1680 = vpop.permute.xlu0 %1679
        %1681 = vset.pattern.permute.xlu0 0
        %1682 = vperm.xlu0 %1681, %v1567
        %v1683 = vpop.permute.xlu0 %1682
        %1684 = vset.pattern.permute.xlu0 0
        %1685 = vperm.xlu0 %1684, %v1616
        %v1686 = vpop.permute.xlu0 %1685
        %1687 = vset.pattern.permute.xlu0 0
        %1688 = vperm.xlu0 %1687, %v1665
        %v1689 = vpop.permute.xlu0 %1688
        %v1690 = vlaneseq
        %v1691 = vshrl.u32 %v1690, 7
        %v1692 = vsub.s32 %v913, %v1691
        %v1693 = vrot.slane %v1668, %v1692
        %v1694 = vlaneseq
        %v1695 = vshrl.u32 %v1694, 7
        %v1696 = vsub.s32 %v918, %v1695
        %v1697 = vrot.slane %v1671, %v1696
        %v1698 = vsel %vm923, %v1697, %v1693
        %v1699 = vlaneseq
        %v1700 = vshrl.u32 %v1699, 7
        %v1701 = vsub.s32 %v925, %v1700
        %v1702 = vrot.slane %v1674, %v1701
        %v1703 = vsel %vm930, %v1702, %v1698
        %v1704 = vlaneseq
        %v1705 = vshrl.u32 %v1704, 7
        %v1706 = vsub.s32 %v932, %v1705
        %v1707 = vrot.slane %v1677, %v1706
        %v1708 = vsel %vm937, %v1707, %v1703
        %v1709 = vlaneseq
        %v1710 = vshrl.u32 %v1709, 7
        %v1711 = vsub.s32 %v939, %v1710
        %v1712 = vrot.slane %v1680, %v1711
        %v1713 = vsel %vm944, %v1712, %v1708
        %v1714 = vlaneseq
        %v1715 = vshrl.u32 %v1714, 7
        %v1716 = vsub.s32 %v946, %v1715
        %v1717 = vrot.slane %v1683, %v1716
        %v1718 = vsel %vm951, %v1717, %v1713
        %v1719 = vlaneseq
        %v1720 = vshrl.u32 %v1719, 7
        %v1721 = vsub.s32 %v953, %v1720
        %v1722 = vrot.slane %v1686, %v1721
        %v1723 = vsel %vm958, %v1722, %v1718
        %v1724 = vlaneseq
        %v1725 = vshrl.u32 %v1724, 7
        %v1726 = vsub.s32 %v960, %v1725
        %v1727 = vrot.slane %v1689, %v1726
        %v1728 = vsel %vm965, %v1727, %v1723
        %v1730 = vunpack.c.l.s4 1966171168
        %v1731 = vunpack.c.0.s8 %v1730
        %v1732 = vlaneseq
        %v1733 = vshrl.u32 %v1732, 7
        %v1734 = vsub.s32 %v1731, %v1733
        %v1735 = vrot.slane %v1728, %v1734
        %v1737 = vunpack.c.l.s4 1966171168
        %v1738 = vunpack.c.0.s8 %v1737
        %v1739 = vlaneseq
        %v1740 = vshrl.u32 %v1739, 7
        %v1741 = vsub.s32 %v1738, %v1740
        %v1742 = vrot.slane %v1735, %v1741
        %v1744 = vmax.f32 %v985, %v1742
        %1745 = vst.msk [vmem:[#allocation3] sm:$0x1] %vm983, %v1744
        // Predicated region
        $region37: #{channel_attention.1} parent=31 // pred_check
          %p1746 = pneg %p199
        $region38: #{channel_attention.1} parent=31 // pred_check_branch
          %1748 = sbr.rel (%p1746) target = $region40
        $region39: #{channel_attention.1} parent=31 // pred_region
          %v1749 = vld [vmem:[#allocation2] sm:$0x1]
          %v1750 = vmul.f32 %v1749, 0.015625
          %v1751 = vld [vmem:[#allocation3] sm:$0x1]
          %v1753 = vlaneseq
          %v1754 = vshrl.u32 %v1753, 7
          %v1755 = vsub.s32 0, %v1754
          %v1756 = vrot.slane %v1751, %v1755
          %vm1758 = vcmask 1040384
          %v1759 = vsel %vm1758, %v1750, %v1756
          %v1760 = vld [vmem:[%s1] sm:$0xf]
          %v1761 = vld [vmem:[%s2] sm:$0xff]
          %v1762 = vld [vmem:[%s2 + $0x8] sm:$0xff]
          %v1763 = vld [vmem:[%s2 + $0x10] sm:$0xff]
          %v1764 = vld [vmem:[%s2 + $0x18] sm:$0xff]
          %v1765 = vld [vmem:[%s2 + $0x20] sm:$0xff]
          %v1766 = vld [vmem:[%s2 + $0x28] sm:$0xff]
          %v1767 = vld [vmem:[%s2 + $0x30] sm:$0xff]
          %v1768 = vld [vmem:[%s2 + $0x38] sm:$0xff]
          %v1770 = vsel %vm207, %v1759, 0
          %v1773 = vsel %vm207, %v1760, 0
          %1775 = vmatprep.subr.mxu0 0.0
          %1776 = vmatpush1.xpose.msra.mxu0 %v1773
          %1777 = vmatprep.subr.mxu0 0.0
          %1778 = vmatpush1.xpose.msra.mxu0 0.0
          %1779 = vmatprep.subr.mxu0 0.0
          %1780 = vmatpush1.xpose.msra.mxu0 0.0
          %1781 = vmatprep.subr.mxu0 0.0
          %1782 = vmatpush1.xpose.msra.mxu0 0.0
          %1783 = vmatprep.subr.mxu0 0.0
          %1784 = vmatpush1.xpose.msra.mxu0 0.0
          %1785 = vmatprep.subr.mxu0 0.0
          %1786 = vmatpush1.xpose.msra.mxu0 0.0
          %1787 = vmatprep.subr.mxu0 0.0
          %1788 = vmatpush1.xpose.msra.mxu0 0.0
          %1789 = vmatprep.subr.mxu0 0.0
          %1790 = vmatpush1.xpose.msra.mxu0 0.0
          %1791 = vmatprep.subr.mxu0 0.0
          %1792 = vmatpush1.xpose.msra.mxu0 0.0
          %1793 = vmatprep.subr.mxu0 0.0
          %1794 = vmatpush1.xpose.msra.mxu0 0.0
          %1795 = vmatprep.subr.mxu0 0.0
          %1796 = vmatpush1.xpose.msra.mxu0 0.0
          %1797 = vmatprep.subr.mxu0 0.0
          %1798 = vmatpush1.xpose.msra.mxu0 0.0
          %1799 = vmatprep.subr.mxu0 0.0
          %1800 = vmatpush1.xpose.msra.mxu0 0.0
          %1801 = vmatprep.subr.mxu0 0.0
          %1802 = vmatpush1.xpose.msra.mxu0 0.0
          %1803 = vmatprep.subr.mxu0 0.0
          %1804 = vmatpush1.xpose.msra.mxu0 0.0
          %1805 = vmatprep.subr.mxu0 0.0
          %1806 = vmatpush1.xpose.msra.mxu0 0.0
          %1807 = vmatprep.subr.mxu0 0.0
          %1808 = vmatpush1.xpose.msra.mxu0 0.0
          %1809 = vmatprep.subr.mxu0 0.0
          %1810 = vmatpush1.xpose.msra.mxu0 0.0
          %1811 = vmatprep.subr.mxu0 0.0
          %1812 = vmatpush1.xpose.msra.mxu0 0.0
          %1813 = vmatprep.subr.mxu0 0.0
          %1814 = vmatpush1.xpose.msra.mxu0 0.0
          %1815 = vmatprep.subr.mxu0 0.0
          %1816 = vmatpush1.xpose.msra.mxu0 0.0
          %1817 = vmatprep.subr.mxu0 0.0
          %1818 = vmatpush1.xpose.msra.mxu0 0.0
          %1819 = vmatprep.subr.mxu0 0.0
          %1820 = vmatpush1.xpose.msra.mxu0 0.0
          %1821 = vmatprep.subr.mxu0 0.0
          %1822 = vmatpush1.xpose.msra.mxu0 0.0
          %1823 = vmatprep.subr.mxu0 0.0
          %1824 = vmatpush1.xpose.msra.mxu0 0.0
          %1825 = vmatprep.subr.mxu0 0.0
          %1826 = vmatpush1.xpose.msra.mxu0 0.0
          %1827 = vmatprep.subr.mxu0 0.0
          %1828 = vmatpush1.xpose.msra.mxu0 0.0
          %1829 = vmatprep.subr.mxu0 0.0
          %1830 = vmatpush1.xpose.msra.mxu0 0.0
          %1831 = vmatprep.subr.mxu0 0.0
          %1832 = vmatpush1.xpose.msra.mxu0 0.0
          %1833 = vmatprep.subr.mxu0 0.0
          %1834 = vmatpush1.xpose.msra.mxu0 0.0
          %1835 = vmatprep.subr.mxu0 0.0
          %1836 = vmatpush1.xpose.msra.mxu0 0.0
          %1837 = vmatprep.subr.mxu0 0.0
          %1838 = vmatpush1.xpose.msra.mxu0 0.0
          %1839 = vmatprep.mubr.f32.mxu0 0.0
          %1840 = vmatmul.mubr.f32.gmra.mrb[0].mxu0 %v1770
          %v1841 = vpop.f32.mrb[0].mxu0
          %v1842 = vadd.f32 0.0, %v1841
          %v1843 = vpop.f32.mrb[0].mxu0
          %1844 = vdwg.mxu0
          %v1845 = vmax.f32 %v1842, 0.0
          %vm1846 = vcmask 31744
          %v1848 = vsel %vm1846, %v1845, 0
          %v1851 = vsel %vm1846, %v1761, 0
          %v1854 = vsel %vm1846, %v1762, 0
          %v1857 = vsel %vm1846, %v1763, 0
          %v1860 = vsel %vm1846, %v1764, 0
          %v1863 = vsel %vm1846, %v1765, 0
          %v1866 = vsel %vm1846, %v1766, 0
          %v1869 = vsel %vm1846, %v1767, 0
          %v1872 = vsel %vm1846, %v1768, 0
          %1874 = vmatprep.subr.mxu0 0.0
          %1875 = vmatpush1.xpose.msra.mxu0 %v1851
          %1876 = vmatprep.subr.mxu0 0.0
          %1877 = vmatpush1.xpose.msra.mxu0 %v1854
          %1878 = vmatprep.subr.mxu0 0.0
          %1879 = vmatpush1.xpose.msra.mxu0 %v1857
          %1880 = vmatprep.subr.mxu0 0.0
          %1881 = vmatpush1.xpose.msra.mxu0 %v1860
          %1882 = vmatprep.subr.mxu0 0.0
          %1883 = vmatpush1.xpose.msra.mxu0 %v1863
          %1884 = vmatprep.subr.mxu0 0.0
          %1885 = vmatpush1.xpose.msra.mxu0 %v1866
          %1886 = vmatprep.subr.mxu0 0.0
          %1887 = vmatpush1.xpose.msra.mxu0 %v1869
          %1888 = vmatprep.subr.mxu0 0.0
          %1889 = vmatpush1.xpose.msra.mxu0 %v1872
          %1890 = vmatprep.subr.mxu0 0.0
          %1891 = vmatpush1.xpose.msra.mxu0 0.0
          %1892 = vmatprep.subr.mxu0 0.0
          %1893 = vmatpush1.xpose.msra.mxu0 0.0
          %1894 = vmatprep.subr.mxu0 0.0
          %1895 = vmatpush1.xpose.msra.mxu0 0.0
          %1896 = vmatprep.subr.mxu0 0.0
          %1897 = vmatpush1.xpose.msra.mxu0 0.0
          %1898 = vmatprep.subr.mxu0 0.0
          %1899 = vmatpush1.xpose.msra.mxu0 0.0
          %1900 = vmatprep.subr.mxu0 0.0
          %1901 = vmatpush1.xpose.msra.mxu0 0.0
          %1902 = vmatprep.subr.mxu0 0.0
          %1903 = vmatpush1.xpose.msra.mxu0 0.0
          %1904 = vmatprep.subr.mxu0 0.0
          %1905 = vmatpush1.xpose.msra.mxu0 0.0
          %1906 = vmatprep.subr.mxu0 0.0
          %1907 = vmatpush1.xpose.msra.mxu0 0.0
          %1908 = vmatprep.subr.mxu0 0.0
          %1909 = vmatpush1.xpose.msra.mxu0 0.0
          %1910 = vmatprep.subr.mxu0 0.0
          %1911 = vmatpush1.xpose.msra.mxu0 0.0
          %1912 = vmatprep.subr.mxu0 0.0
          %1913 = vmatpush1.xpose.msra.mxu0 0.0
          %1914 = vmatprep.subr.mxu0 0.0
          %1915 = vmatpush1.xpose.msra.mxu0 0.0
          %1916 = vmatprep.subr.mxu0 0.0
          %1917 = vmatpush1.xpose.msra.mxu0 0.0
          %1918 = vmatprep.subr.mxu0 0.0
          %1919 = vmatpush1.xpose.msra.mxu0 0.0
          %1920 = vmatprep.subr.mxu0 0.0
          %1921 = vmatpush1.xpose.msra.mxu0 0.0
          %1922 = vmatprep.subr.mxu0 0.0
          %1923 = vmatpush1.xpose.msra.mxu0 0.0
          %1924 = vmatprep.subr.mxu0 0.0
          %1925 = vmatpush1.xpose.msra.mxu0 0.0
          %1926 = vmatprep.subr.mxu0 0.0
          %1927 = vmatpush1.xpose.msra.mxu0 0.0
          %1928 = vmatprep.subr.mxu0 0.0
          %1929 = vmatpush1.xpose.msra.mxu0 0.0
          %1930 = vmatprep.subr.mxu0 0.0
          %1931 = vmatpush1.xpose.msra.mxu0 0.0
          %1932 = vmatprep.subr.mxu0 0.0
          %1933 = vmatpush1.xpose.msra.mxu0 0.0
          %1934 = vmatprep.subr.mxu0 0.0
          %1935 = vmatpush1.xpose.msra.mxu0 0.0
          %1936 = vmatprep.subr.mxu0 0.0
          %1937 = vmatpush1.xpose.msra.mxu0 0.0
          %1938 = vmatprep.mubr.f32.mxu0 0.0
          %1939 = vmatmul.mubr.f32.gmra.mrb[0].mxu0 %v1848
          %v1940 = vpop.f32.mrb[0].mxu0
          %v1941 = vadd.f32 0.0, %v1940
          %v1942 = vpop.f32.mrb[0].mxu0
          %1943 = vdwg.mxu0
          %v1945 = vrot.slane %v1941, 1
          %v1947 = vadd.f32 %v1941, %v1945
          %v1948 = vxor.u32 %v1947, 2147483648
          %v1949 = vmul.f32 %v1948, 1.442695
          %v1950 = vpow.pop %v1949
          %v1951 = vadd.f32 %v1950, 1.0
          %v1952 = vrcp.pop %v1951
          %v1953 = vmul.f32 1.0, %v1952
          %1954 = vst.msk [vmem:[%s182] sm:$0x1] %vm983, %v1953
        $region40: #{channel_attention.1} parent=31 // pred_fallthru
          _
        %s1955 = sand.u32 %s107, 1
        %s1956 = scalar_lea.sflag [#allocation5], %s1955
        %s1957 = sand.u32 %s107, 1
        %s1958 = scalar_lea.vmem [#allocation4], %s1957
        // Predicated region
        $region41: #{channel_attention.1} parent=31 // pred_check
          %p1959 = pneg %p117
        $region42: #{channel_attention.1} parent=31 // pred_check_branch
          %1961 = sbr.rel (%p1959) target = $region44
        $region43: #{channel_attention.1} parent=31 // pred_region
          %s1963 = ssub.s32 16, 16
          %1964 = vsyncadd %s1956, %s1963
          %s1965 = smul.addr %s21, 16
          %s1966 = scalar_lea.hbm %s3, %s1965
          %s1968 = sshll.u32 %s1958, 4
          %s1969 = int_to_ptr.vmem [resolvable:$true] %s1968
          %1971 = dma.vmem_to_hbm [thread:$0]  %s1969, 16, %s1966, %s1956
        $region44: #{channel_attention.1} parent=31 // pred_fallthru
          _
      $region32: #{channel_attention.1} parent=5 // pred_fallthru
        _
      %p1972 = scmp.le.s32.totalorder 2, %s12
      // Predicated region
      $region45: #{channel_attention.1} parent=5 // pred_check
        %p1973 = pneg %p1972
      $region46: #{channel_attention.1} parent=5 // pred_check_branch
        %1975 = sbr.rel (%p1973) target = $region48
      $region47: #{channel_attention.1} parent=5 // pred_region
        %s1976 = ssub.s32 %s12, 2
        // Predicated region
        $region49: #{channel_attention.1} parent=47 // pred_check
          %p1977 = pneg %p123
        $region50: #{channel_attention.1} parent=47 // pred_check_branch
          %1979 = sbr.rel (%p1977) target = $region52
        $region51: #{channel_attention.1} parent=47 // pred_region
          %s1980 = sand.u32 %s108, 1
          %s1981 = scalar_lea.sflag [#allocation5], %s1980
          %s1982 = sand.u32 %s108, 1
          %s1983 = scalar_lea.vmem [#allocation4], %s1982
          %1984 = dma.done %s1981, 16
        $region52: #{channel_attention.1} parent=47 // pred_fallthru
          _
      $region48: #{channel_attention.1} parent=5 // pred_fallthru
        _
    $region6: #{channel_attention.1} parent=1 // loop_footer
      %s16 = sadd.s32 1, %s12
    $region7: #{channel_attention.1} parent=1 // loop_footer_branch
      %11 = sbr.rel target = $region3
    $region8: #{channel_attention.1} parent=1 // loop_exit
      _
    %1985 = vsyncpa [#allocation5], 1
    %s1986 = scalar_lea.sflag [#allocation5], 1
    %1987 = vsyncpa %s1986, 1

</llo_original>
